<compile_context>
chip_gen: v7x
topology: tpu7x:2x2x1
jax: 0.10.0
libtpu: 0.0.40
codegen_flags: <defaults>
</compile_context>

<pallas_src>
import functools

import jax
import jax.numpy as jnp
from jax.experimental import pallas as pl
from jax.experimental.pallas import tpu as pltpu


# ---------------------------------------------------------------------------
# helpers
# ---------------------------------------------------------------------------
def _round_up(x: int, m: int) -> int:
    return ((x + m - 1) // m) * m


_ACTIVATIONS = {
    "relu": lambda h: jnp.maximum(h, 0.0),
    "tanh": jnp.tanh,
    "sigmoid": jax.nn.sigmoid,
    "gelu": jax.nn.gelu,
    "elu": jax.nn.elu,
    "leaky_relu": jax.nn.leaky_relu,
    "silu": jax.nn.silu,
    "softplus": jax.nn.softplus,
}
_TRANSCENDENTAL_ACTS = ("tanh", "sigmoid", "gelu", "elu", "silu", "softplus")


# ---------------------------------------------------------------------------
# Fused MLP kernel: one row-tile of x through all layers.
#   refs layout: x_ref, (w1, b1, w2, b2, ..., wL, bL), out_ref
# ---------------------------------------------------------------------------
def _mlp_kernel(x_ref, *refs, n_layers: int, activation: str, compute_dtype):
    out_ref = refs[-1]
    wb = refs[:-1]
    act = _ACTIVATIONS[activation]

    # Cast fused into the kernel (x arrives at its native dtype/width).
    h = x_ref[...].astype(compute_dtype)
    for layer in range(n_layers):
        w = wb[2 * layer][...]          # (K, N_pad) compute_dtype, VMEM-resident
        b = wb[2 * layer + 1][...]      # (1, N_pad) f32
        acc = jnp.dot(h, w, preferred_element_type=jnp.float32) + b   # f32 accumulate
        if layer < n_layers - 1:
            # f32 epilogue on the accumulator (free VPU/EUP filler under the MXU).
            # INVARIANT: padded weight ROWS of the *next* layer are zero, so even
            # activations with act(0) != 0 (sigmoid/softplus) in padded lanes
            # cannot leak into real outputs.
            acc = act(acc)
            # TODO(synk): training-mode dropout (pltpu.prng_*) not implemented;
            # eval-mode nn.Dropout is the identity, matching the reference.
            h = acc.astype(compute_dtype)
        else:
            out_ref[...] = acc.astype(out_ref.dtype)


# ---------------------------------------------------------------------------
# One-time parameter packing (hoisted out of the per-forward path).
# ---------------------------------------------------------------------------
def pack_mlp_params(params, n_layers: int, compute_dtype=jnp.bfloat16):
    ws = [params[f"w{i + 1}"] for i in range(n_layers)]
    bs = [params[f"b{i + 1}"] for i in range(n_layers)]
    f_in = ws[0].shape[0]
    dims = [f_in] + [w.shape[1] for w in ws]
    # First contraction dim stays UNPADDED (must match raw x); all layer output
    # dims (and subsequent contraction dims) are lane-padded to 128.
    pdims = [f_in] + [_round_up(d, 128) for d in dims[1:]]

    packed = []
    for i, (w, b) in enumerate(zip(ws, bs)):
        wp = (jnp.zeros((pdims[i], pdims[i + 1]), compute_dtype)
              .at[: w.shape[0], : w.shape[1]].set(w.astype(compute_dtype)))
        bp = (jnp.zeros((1, pdims[i + 1]), jnp.float32)
              .at[0, : b.shape[0]].set(b.astype(jnp.float32)))
        packed += [wp, bp]
    return packed, dims, pdims


# ---------------------------------------------------------------------------
# Wrapper: tile rows, launch one fused pallas_call, slice padding off.
# ---------------------------------------------------------------------------
def mlp_forward_packed(x, packed, dims, pdims, *, n_layers: int,
                       activation: str = "relu", block_rows: int = 512,
                       compute_dtype=jnp.bfloat16):
    m, f_in = x.shape
    assert f_in == dims[0], (f_in, dims[0])

    # Row tile: multiple of 8, large (amortizes ~0.35us/step), and >= 2 grid
    # steps whenever possible so both v7x TensorCores get work.
    mp = _round_up(m, 8)
    if mp <= block_rows:
        tm = _round_up(pl.cdiv(mp, 2), 8) if mp >= 16 else mp
    else:
        tm = block_rows
    num_steps = pl.cdiv(mp, tm)
    mp = num_steps * tm

    # Only the ROW axis is ever padded (and only when needed); the feature axis
    # keeps its true width, so x is streamed from HBM once at native size.
    xp = x if mp == m else jnp.pad(x, ((0, mp - m), (0, 0)))

    out_dtype = compute_dtype  # bf16 output stream; slice/cast in the wrapper
    grid = (num_steps,)
    x_spec = pl.BlockSpec((tm, f_in), lambda i: (i, 0))
    out_spec = pl.BlockSpec((tm, pdims[-1]), lambda i: (i, 0))

    # Advisory cost estimate for the XLA scheduler.
    flops = sum(2 * mp * pdims[i] * pdims[i + 1] for i in range(n_layers))
    transcendentals = (mp * sum(pdims[1:n_layers])
                       if activation in _TRANSCENDENTAL_ACTS else 0)
    bytes_accessed = int(xp.size * xp.dtype.itemsize
                         + sum(a.size * a.dtype.itemsize for a in packed)
                         + mp * pdims[-1] * jnp.dtype(out_dtype).itemsize)

    # VMEM budget: resident weights (worst case double-buffered) + pipelined
    # x/out tiles + per-layer f32/bf16 intermediates, with ~2x headroom.
    wb_bytes = sum(a.size * a.dtype.itemsize for a in packed)
    tile_bytes = (2 * tm * f_in * x.dtype.itemsize
                  + 2 * tm * pdims[-1] * jnp.dtype(out_dtype).itemsize
                  + sum(tm * pdims[i + 1] * 6 for i in range(n_layers)))
    vmem_limit = int(min(max(2 * (2 * wb_bytes + tile_bytes) + (4 << 20),
                             16 << 20), 100 << 20))

    kernel = functools.partial(_mlp_kernel, n_layers=n_layers,
                               activation=activation, compute_dtype=compute_dtype)

    def _launch(single_buffer_weights: bool):
        if single_buffer_weights:
            # Constant index_map -> weights are VMEM-resident; double buffering
            # buys nothing and doubles resident VMEM (matters on v7x 64 MiB/TC).
            def wb_spec(shape):
                return pl.BlockSpec(shape, lambda i: (0, 0),
                                    pipeline_mode=pl.Buffered(1))
        else:
            def wb_spec(shape):
                return pl.BlockSpec(shape, lambda i: (0, 0))
        in_specs = [x_spec] + [wb_spec(a.shape) for a in packed]
        return pl.pallas_call(
            kernel,
            out_shape=jax.ShapeDtypeStruct((mp, pdims[-1]), out_dtype),
            grid=grid,
            in_specs=in_specs,
            out_specs=out_spec,
            compiler_params=pltpu.CompilerParams(
                dimension_semantics=("parallel",),   # row tiles shard across TCs
                vmem_limit_bytes=vmem_limit),
            cost_estimate=pl.CostEstimate(
                flops=int(flops), transcendentals=int(transcendentals),
                bytes_accessed=bytes_accessed),
        )(xp, *packed)

    attempts = [True, False] if hasattr(pl, "Buffered") else [False]
    out_padded, last_err = None, None
    for single in attempts:
        try:
            out_padded = _launch(single)
            break
        except Exception as err:  # fall back if Buffered(1) is unsupported
            last_err = err
    if out_padded is None:
        raise last_err

    return out_padded[:m, : dims[-1]].astype(x.dtype)


# ---------------------------------------------------------------------------
# Module-level factory mirroring MultiLayerPerceptron (eval mode, tensor branch).
# ---------------------------------------------------------------------------
def make_mlp(params, *, n_layers: int = 3, activation: str = "relu",
             dropout: float = 0.5, compute_dtype=jnp.bfloat16,
             block_rows: int = 512):
    if activation not in _ACTIVATIONS:
        raise ValueError(f"Unsupported activation: {activation!r}")
    del dropout  # eval-mode nn.Dropout is identity (see TODO in kernel)
    packed, dims, pdims = pack_mlp_params(params, n_layers, compute_dtype)

    def forward(data, proteins=None):
        # TODO(synk): the non-tensor (PyG Data) branch returning
        # (x, edge_index, edge_attr) is not implemented; tensor branch only.
        del proteins  # unused in the reference forward
        out = mlp_forward_packed(data, packed, dims, pdims, n_layers=n_layers,
                                 activation=activation, block_rows=block_rows,
                                 compute_dtype=compute_dtype)
        return out, None, None

    return forward


# ---------------------------------------------------------------------------
# parameter init (shapes match the nn.Linear stack in the reference module)
# ---------------------------------------------------------------------------
def init_params(key, in_channels, hid_channels, out_channels, n_layers=3):
    hid_channels = in_channels if hid_channels < 0 else hid_channels
    if n_layers == 1:
        layer_dims = [(in_channels, out_channels)]
    else:
        layer_dims = [(in_channels, hid_channels)]
        layer_dims += [(hid_channels, hid_channels)] * (n_layers - 2)
        layer_dims += [(hid_channels, out_channels)]

    params = {}
    keys = jax.random.split(key, n_layers)
    for i, ((fan_in, fan_out), k) in enumerate(zip(layer_dims, keys)):
        lim = jnp.sqrt(6.0 / (fan_in + fan_out))
        params[f"w{i + 1}"] = jax.random.uniform(
            k, (fan_in, fan_out), jnp.float32, -lim, lim)
        params[f"b{i + 1}"] = jnp.zeros((fan_out,), jnp.float32)
    return params


# ---------------------------------------------------------------------------
# demo / self-check
# ---------------------------------------------------------------------------
if __name__ == "__main__":
    key = jax.random.PRNGKey(0)
    k_x, k_p = jax.random.split(key)

    batch = 16
    in_channels = 12
    hid_channels = 32
    out_channels = 7
    n_layers = 3

    x = jax.random.normal(k_x, (batch, in_channels), jnp.float32)
    params = init_params(k_p, in_channels, hid_channels, out_channels, n_layers)

    forward = make_mlp(params, n_layers=n_layers, activation="relu")
    out, ei, ea = forward(x, None)
    out = jax.block_until_ready(out)
    assert out.shape == (batch, out_channels), out.shape
    assert ei is None and ea is None

    # Pure-JAX f32 reference (kernel uses bf16 operands + bf16 output stream).
    ref = x
    for i in range(n_layers):
        ref = ref @ params[f"w{i + 1}"] + params[f"b{i + 1}"]
        if i < n_layers - 1:
            ref = jnp.maximum(ref, 0.0)
    assert bool(jnp.all(jnp.isfinite(out)))
    assert bool(jnp.allclose(out, ref, atol=0.1, rtol=0.1)), (
        float(jnp.max(jnp.abs(out - ref))))

    print("KERNEL_OK")
</pallas_src>

<mosaic_0001>
module attributes {stable_mosaic.version = 11 : i64} {
  func.func @_mlp_kernel(%arg0: i32, %arg1: memref<8x12xf32, #tpu.memory_space<vmem>>, %arg2: memref<12x128xbf16, #tpu.memory_space<vmem>>, %arg3: memref<1x128xf32, #tpu.memory_space<vmem>>, %arg4: memref<128x128xbf16, #tpu.memory_space<vmem>>, %arg5: memref<1x128xf32, #tpu.memory_space<vmem>>, %arg6: memref<128x128xbf16, #tpu.memory_space<vmem>>, %arg7: memref<1x128xf32, #tpu.memory_space<vmem>>, %arg8: memref<8x128xbf16, #tpu.memory_space<vmem>>) attributes {dimension_semantics = [#tpu.dimension_semantics<parallel>], iteration_bounds = array<i64: 2>, scalar_prefetch = 0 : i64, scratch_operands = 0 : i64, tpu.core_type = #tpu.core_type<tc>, window_params = [{transform_indices = @transform_0, window_bounds = array<i64: 8, 12>}, {pipeline_mode = #tpu.pipeline_mode<synchronous>, transform_indices = @transform_1, window_bounds = array<i64: 12, 128>}, {pipeline_mode = #tpu.pipeline_mode<synchronous>, transform_indices = @transform_2, window_bounds = array<i64: 1, 128>}, {pipeline_mode = #tpu.pipeline_mode<synchronous>, transform_indices = @transform_3, window_bounds = array<i64: 128, 128>}, {pipeline_mode = #tpu.pipeline_mode<synchronous>, transform_indices = @transform_4, window_bounds = array<i64: 1, 128>}, {pipeline_mode = #tpu.pipeline_mode<synchronous>, transform_indices = @transform_5, window_bounds = array<i64: 128, 128>}, {pipeline_mode = #tpu.pipeline_mode<synchronous>, transform_indices = @transform_6, window_bounds = array<i64: 1, 128>}, {transform_indices = @transform_7, window_bounds = array<i64: 8, 128>}]} {
    %c0 = arith.constant 0 : index
    %c0_0 = arith.constant 0 : index
    %0 = vector.load %arg1[%c0, %c0_0] : memref<8x12xf32, #tpu.memory_space<vmem>>, vector<8x12xf32>
    %1 = arith.truncf %0 : vector<8x12xf32> to vector<8x12xbf16>
    %c0_1 = arith.constant 0 : index
    %c0_2 = arith.constant 0 : index
    %2 = vector.load %arg2[%c0_1, %c0_2] : memref<12x128xbf16, #tpu.memory_space<vmem>>, vector<12x128xbf16>
    %c0_3 = arith.constant 0 : index
    %c0_4 = arith.constant 0 : index
    %3 = vector.load %arg3[%c0_3, %c0_4] : memref<1x128xf32, #tpu.memory_space<vmem>>, vector<1x128xf32>
    %cst = arith.constant dense<0.000000e+00> : vector<8x128xf32>
    %4 = tpu.matmul %1, %2, %cst {dimension_numbers = #tpu.dot_dimension_numbers<[1], [0], [0], [1], [0, 0, 1, 1], [], []>} : vector<8x12xbf16>, vector<12x128xbf16>, vector<8x128xf32> -> vector<8x128xf32>
    %5 = vector.broadcast %3 : vector<1x128xf32> to vector<8x128xf32>
    %6 = arith.addf %4, %5 : vector<8x128xf32>
    %cst_5 = arith.constant 0.000000e+00 : f32
    %7 = vector.broadcast %cst_5 : f32 to vector<8x128xf32>
    %8 = arith.maximumf %6, %7 : vector<8x128xf32>
    %9 = arith.truncf %8 : vector<8x128xf32> to vector<8x128xbf16>
    %c0_6 = arith.constant 0 : index
    %c0_7 = arith.constant 0 : index
    %10 = vector.load %arg4[%c0_6, %c0_7] : memref<128x128xbf16, #tpu.memory_space<vmem>>, vector<128x128xbf16>
    %c0_8 = arith.constant 0 : index
    %c0_9 = arith.constant 0 : index
    %11 = vector.load %arg5[%c0_8, %c0_9] : memref<1x128xf32, #tpu.memory_space<vmem>>, vector<1x128xf32>
    %cst_10 = arith.constant dense<0.000000e+00> : vector<8x128xf32>
    %12 = tpu.matmul %9, %10, %cst_10 {dimension_numbers = #tpu.dot_dimension_numbers<[1], [0], [0], [1], [0, 0, 1, 1], [], []>} : vector<8x128xbf16>, vector<128x128xbf16>, vector<8x128xf32> -> vector<8x128xf32>
    %13 = vector.broadcast %11 : vector<1x128xf32> to vector<8x128xf32>
    %14 = arith.addf %12, %13 : vector<8x128xf32>
    %cst_11 = arith.constant 0.000000e+00 : f32
    %15 = vector.broadcast %cst_11 : f32 to vector<8x128xf32>
    %16 = arith.maximumf %14, %15 : vector<8x128xf32>
    %17 = arith.truncf %16 : vector<8x128xf32> to vector<8x128xbf16>
    %c0_12 = arith.constant 0 : index
    %c0_13 = arith.constant 0 : index
    %18 = vector.load %arg6[%c0_12, %c0_13] : memref<128x128xbf16, #tpu.memory_space<vmem>>, vector<128x128xbf16>
    %c0_14 = arith.constant 0 : index
    %c0_15 = arith.constant 0 : index
    %19 = vector.load %arg7[%c0_14, %c0_15] : memref<1x128xf32, #tpu.memory_space<vmem>>, vector<1x128xf32>
    %cst_16 = arith.constant dense<0.000000e+00> : vector<8x128xf32>
    %20 = tpu.matmul %17, %18, %cst_16 {dimension_numbers = #tpu.dot_dimension_numbers<[1], [0], [0], [1], [0, 0, 1, 1], [], []>} : vector<8x128xbf16>, vector<128x128xbf16>, vector<8x128xf32> -> vector<8x128xf32>
    %21 = vector.broadcast %19 : vector<1x128xf32> to vector<8x128xf32>
    %22 = arith.addf %20, %21 : vector<8x128xf32>
    %23 = arith.truncf %22 : vector<8x128xf32> to vector<8x128xbf16>
    %c0_17 = arith.constant 0 : index
    %c0_18 = arith.constant 0 : index
    %24 = vector.load %arg8[%c0_17, %c0_18] : memref<8x128xbf16, #tpu.memory_space<vmem>>, vector<8x128xbf16>
    tpu.vector_store %arg8[%c0_17, %c0_18], %23 {strides = array<i32>} : memref<8x128xbf16, #tpu.memory_space<vmem>>, vector<8x128xbf16>,
    return
  }
  func.func @transform_0(%arg0: i32) -> (i32, i32) {
    %c0_i32 = arith.constant 0 : i32
    %c0_i32_0 = arith.constant 0 : i32
    return %arg0, %c0_i32 : i32, i32
  }
  func.func @transform_1(%arg0: i32) -> (i32, i32) {
    %c0_i32 = arith.constant 0 : i32
    %c0_i32_0 = arith.constant 0 : i32
    %c0_i32_1 = arith.constant 0 : i32
    return %c0_i32, %c0_i32_0 : i32, i32
  }
  func.func @transform_2(%arg0: i32) -> (i32, i32) {
    %c0_i32 = arith.constant 0 : i32
    %c0_i32_0 = arith.constant 0 : i32
    %c0_i32_1 = arith.constant 0 : i32
    return %c0_i32, %c0_i32_0 : i32, i32
  }
  func.func @transform_3(%arg0: i32) -> (i32, i32) {
    %c0_i32 = arith.constant 0 : i32
    %c0_i32_0 = arith.constant 0 : i32
    %c0_i32_1 = arith.constant 0 : i32
    return %c0_i32, %c0_i32_0 : i32, i32
  }
  func.func @transform_4(%arg0: i32) -> (i32, i32) {
    %c0_i32 = arith.constant 0 : i32
    %c0_i32_0 = arith.constant 0 : i32
    %c0_i32_1 = arith.constant 0 : i32
    return %c0_i32, %c0_i32_0 : i32, i32
  }
  func.func @transform_5(%arg0: i32) -> (i32, i32) {
    %c0_i32 = arith.constant 0 : i32
    %c0_i32_0 = arith.constant 0 : i32
    %c0_i32_1 = arith.constant 0 : i32
    return %c0_i32, %c0_i32_0 : i32, i32
  }
  func.func @transform_6(%arg0: i32) -> (i32, i32) {
    %c0_i32 = arith.constant 0 : i32
    %c0_i32_0 = arith.constant 0 : i32
    %c0_i32_1 = arith.constant 0 : i32
    return %c0_i32, %c0_i32_0 : i32, i32
  }
  func.func @transform_7(%arg0: i32) -> (i32, i32) {
    %c0_i32 = arith.constant 0 : i32
    %c0_i32_0 = arith.constant 0 : i32
    return %arg0, %c0_i32 : i32, i32
  }
}

module attributes {stable_mosaic.version = 11 : i64} {
  func.func @_mlp_kernel(%arg0: i32, %arg1: memref<8x12xf32, #tpu.memory_space<vmem>>, %arg2: memref<12x128xbf16, #tpu.memory_space<vmem>>, %arg3: memref<1x128xf32, #tpu.memory_space<vmem>>, %arg4: memref<128x128xbf16, #tpu.memory_space<vmem>>, %arg5: memref<1x128xf32, #tpu.memory_space<vmem>>, %arg6: memref<128x128xbf16, #tpu.memory_space<vmem>>, %arg7: memref<1x128xf32, #tpu.memory_space<vmem>>, %arg8: memref<8x128xbf16, #tpu.memory_space<vmem>>) attributes {dimension_semantics = [#tpu.dimension_semantics<parallel>], iteration_bounds = array<i64: 2>, scalar_prefetch = 0 : i64, scratch_operands = 0 : i64, tpu.core_type = #tpu.core_type<tc>, window_params = [{transform_indices = @transform_0, window_bounds = array<i64: 8, 12>}, {pipeline_mode = #tpu.pipeline_mode<synchronous>, transform_indices = @transform_1, window_bounds = array<i64: 12, 128>}, {pipeline_mode = #tpu.pipeline_mode<synchronous>, transform_indices = @transform_2, window_bounds = array<i64: 1, 128>}, {pipeline_mode = #tpu.pipeline_mode<synchronous>, transform_indices = @transform_3, window_bounds = array<i64: 128, 128>}, {pipeline_mode = #tpu.pipeline_mode<synchronous>, transform_indices = @transform_4, window_bounds = array<i64: 1, 128>}, {pipeline_mode = #tpu.pipeline_mode<synchronous>, transform_indices = @transform_5, window_bounds = array<i64: 128, 128>}, {pipeline_mode = #tpu.pipeline_mode<synchronous>, transform_indices = @transform_6, window_bounds = array<i64: 1, 128>}, {transform_indices = @transform_7, window_bounds = array<i64: 8, 128>}]} {
    %c0 = arith.constant 0 : index
    %c0_0 = arith.constant 0 : index
    %0 = vector.load %arg1[%c0, %c0_0] : memref<8x12xf32, #tpu.memory_space<vmem>>, vector<8x12xf32>
    %1 = arith.truncf %0 : vector<8x12xf32> to vector<8x12xbf16>
    %c0_1 = arith.constant 0 : index
    %c0_2 = arith.constant 0 : index
    %2 = vector.load %arg2[%c0_1, %c0_2] : memref<12x128xbf16, #tpu.memory_space<vmem>>, vector<12x128xbf16>
    %c0_3 = arith.constant 0 : index
    %c0_4 = arith.constant 0 : index
    %3 = vector.load %arg3[%c0_3, %c0_4] : memref<1x128xf32, #tpu.memory_space<vmem>>, vector<1x128xf32>
    %cst = arith.constant dense<0.000000e+00> : vector<8x128xf32>
    %4 = tpu.matmul %1, %2, %cst {dimension_numbers = #tpu.dot_dimension_numbers<[1], [0], [0], [1], [0, 0, 1, 1], [], []>} : vector<8x12xbf16>, vector<12x128xbf16>, vector<8x128xf32> -> vector<8x128xf32>
    %5 = vector.broadcast %3 : vector<1x128xf32> to vector<8x128xf32>
    %6 = arith.addf %4, %5 : vector<8x128xf32>
    %cst_5 = arith.constant 0.000000e+00 : f32
    %7 = vector.broadcast %cst_5 : f32 to vector<8x128xf32>
    %8 = arith.maximumf %6, %7 : vector<8x128xf32>
    %9 = arith.truncf %8 : vector<8x128xf32> to vector<8x128xbf16>
    %c0_6 = arith.constant 0 : index
    %c0_7 = arith.constant 0 : index
    %10 = vector.load %arg4[%c0_6, %c0_7] : memref<128x128xbf16, #tpu.memory_space<vmem>>, vector<128x128xbf16>
    %c0_8 = arith.constant 0 : index
    %c0_9 = arith.constant 0 : index
    %11 = vector.load %arg5[%c0_8, %c0_9] : memref<1x128xf32, #tpu.memory_space<vmem>>, vector<1x128xf32>
    %cst_10 = arith.constant dense<0.000000e+00> : vector<8x128xf32>
    %12 = tpu.matmul %9, %10, %cst_10 {dimension_numbers = #tpu.dot_dimension_numbers<[1], [0], [0], [1], [0, 0, 1, 1], [], []>} : vector<8x128xbf16>, vector<128x128xbf16>, vector<8x128xf32> -> vector<8x128xf32>
    %13 = vector.broadcast %11 : vector<1x128xf32> to vector<8x128xf32>
    %14 = arith.addf %12, %13 : vector<8x128xf32>
    %cst_11 = arith.constant 0.000000e+00 : f32
    %15 = vector.broadcast %cst_11 : f32 to vector<8x128xf32>
    %16 = arith.maximumf %14, %15 : vector<8x128xf32>
    %17 = arith.truncf %16 : vector<8x128xf32> to vector<8x128xbf16>
    %c0_12 = arith.constant 0 : index
    %c0_13 = arith.constant 0 : index
    %18 = vector.load %arg6[%c0_12, %c0_13] : memref<128x128xbf16, #tpu.memory_space<vmem>>, vector<128x128xbf16>
    %c0_14 = arith.constant 0 : index
    %c0_15 = arith.constant 0 : index
    %19 = vector.load %arg7[%c0_14, %c0_15] : memref<1x128xf32, #tpu.memory_space<vmem>>, vector<1x128xf32>
    %cst_16 = arith.constant dense<0.000000e+00> : vector<8x128xf32>
    %20 = tpu.matmul %17, %18, %cst_16 {dimension_numbers = #tpu.dot_dimension_numbers<[1], [0], [0], [1], [0, 0, 1, 1], [], []>} : vector<8x128xbf16>, vector<128x128xbf16>, vector<8x128xf32> -> vector<8x128xf32>
    %21 = vector.broadcast %19 : vector<1x128xf32> to vector<8x128xf32>
    %22 = arith.addf %20, %21 : vector<8x128xf32>
    %23 = arith.truncf %22 : vector<8x128xf32> to vector<8x128xbf16>
    %c0_17 = arith.constant 0 : index
    %c0_18 = arith.constant 0 : index
    %24 = vector.load %arg8[%c0_17, %c0_18] : memref<8x128xbf16, #tpu.memory_space<vmem>>, vector<8x128xbf16>
    tpu.vector_store %arg8[%c0_17, %c0_18], %23 {strides = array<i32>} : memref<8x128xbf16, #tpu.memory_space<vmem>>, vector<8x128xbf16>,
    return
  }
  func.func @transform_0(%arg0: i32) -> (i32, i32) {
    %c0_i32 = arith.constant 0 : i32
    %c0_i32_0 = arith.constant 0 : i32
    return %arg0, %c0_i32 : i32, i32
  }
  func.func @transform_1(%arg0: i32) -> (i32, i32) {
    %c0_i32 = arith.constant 0 : i32
    %c0_i32_0 = arith.constant 0 : i32
    %c0_i32_1 = arith.constant 0 : i32
    return %c0_i32, %c0_i32_0 : i32, i32
  }
  func.func @transform_2(%arg0: i32) -> (i32, i32) {
    %c0_i32 = arith.constant 0 : i32
    %c0_i32_0 = arith.constant 0 : i32
    %c0_i32_1 = arith.constant 0 : i32
    return %c0_i32, %c0_i32_0 : i32, i32
  }
  func.func @transform_3(%arg0: i32) -> (i32, i32) {
    %c0_i32 = arith.constant 0 : i32
    %c0_i32_0 = arith.constant 0 : i32
    %c0_i32_1 = arith.constant 0 : i32
    return %c0_i32, %c0_i32_0 : i32, i32
  }
  func.func @transform_4(%arg0: i32) -> (i32, i32) {
    %c0_i32 = arith.constant 0 : i32
    %c0_i32_0 = arith.constant 0 : i32
    %c0_i32_1 = arith.constant 0 : i32
    return %c0_i32, %c0_i32_0 : i32, i32
  }
  func.func @transform_5(%arg0: i32) -> (i32, i32) {
    %c0_i32 = arith.constant 0 : i32
    %c0_i32_0 = arith.constant 0 : i32
    %c0_i32_1 = arith.constant 0 : i32
    return %c0_i32, %c0_i32_0 : i32, i32
  }
  func.func @transform_6(%arg0: i32) -> (i32, i32) {
    %c0_i32 = arith.constant 0 : i32
    %c0_i32_0 = arith.constant 0 : i32
    %c0_i32_1 = arith.constant 0 : i32
    return %c0_i32, %c0_i32_0 : i32, i32
  }
  func.func @transform_7(%arg0: i32) -> (i32, i32) {
    %c0_i32 = arith.constant 0 : i32
    %c0_i32_0 = arith.constant 0 : i32
    return %arg0, %c0_i32 : i32, i32
  }
}

</mosaic_0001>

<llo_original>
// kernel: tpu_custom_call.1
$region0: #{tpu_custom_call.1}
  #allocation0 [shape = 'u32[]', space=smem, size = 0x4, offset = 0x4, fixed_abs, tag = 'smem constant byte address 0x4 - core index']
  #allocation1 [shape = 'u32[144,128]{1,0:T(1,128)}', space=vmem, size = 0x12000, scoped, tag = 'internal scratch']
  %s0 = inlined_call_operand.hbm [shape: f32[16,12], index: 0, kind: input, shape index: {}]
  %s1 = inlined_call_operand.hbm [shape: bf16[12,128], index: 1, kind: input, shape index: {}]
  %s2 = inlined_call_operand.vmem [shape: f32[1,128], index: 2, kind: input, shape index: {}]
  %s3 = inlined_call_operand.hbm [shape: bf16[128,128], index: 3, kind: input, shape index: {}]
  %s4 = inlined_call_operand.vmem [shape: f32[1,128], index: 4, kind: input, shape index: {}]
  %s5 = inlined_call_operand.hbm [shape: bf16[128,128], index: 5, kind: input, shape index: {}]
  %s6 = inlined_call_operand.vmem [shape: f32[1,128], index: 6, kind: input, shape index: {}]
  %s7 = inlined_call_operand.hbm [shape: bf16[16,128], index: 7, kind: output, shape index: {}]
  %s8 = sld [smem:[#allocation0]]
  $region77: #{tpu_custom_call.1} parent=0
    _
  %s10 = ssub.s32 1, %s8
  %s11 = scalar_select 0, %s10, %s8
  $region1: #{tpu_custom_call.1} parent=0
    #allocation2 [shape = 'u8[8192]{0}', space=vmem, size = 0x2000, scoped, tag = 'input window, operand 0']
    #allocation3 [shape = 's32[2]{0}', space=sflag, size = 0x8, scoped, tag = 'scoped memory for tpu_custom_call.1']
    #allocation4 [shape = 's32[2]{0}', space=sflag, size = 0x8, scoped, tag = 'scoped memory for tpu_custom_call.1']
    #allocation5 [shape = 'u8[4096]{0}', space=vmem, size = 0x1000, scoped, tag = 'input window, operand 1, single buffered']
    #allocation6 [shape = 's32[1]{0}', space=sflag, size = 0x4, scoped, tag = 'scoped memory for tpu_custom_call.1']
    #allocation7 [shape = 'u8[32768]{0}', space=vmem, size = 0x8000, scoped, tag = 'input window, operand 3, single buffered']
    #allocation8 [shape = 'u8[32768]{0}', space=vmem, size = 0x8000, scoped, tag = 'input window, operand 5, single buffered']
    #allocation9 [shape = 's32[1]{0}', space=sflag, size = 0x4, scoped, tag = 'scoped memory for tpu_custom_call.1']
    #allocation10 [shape = 'u8[4096]{0}', space=vmem, size = 0x1000, scoped, tag = 'output window, operand 0']
    %12 = vsyncpa [#allocation3], 0
    %s13 = scalar_lea.sflag [#allocation3], 1
    %14 = vsyncpa %s13, 0
    %15 = vsyncpa [#allocation6], 0
    %16 = vsyncpa [#allocation9], 0
    %17 = vsyncpa [#allocation4], 0
    %s18 = scalar_lea.sflag [#allocation4], 1
    %19 = vsyncpa %s18, 0
    loop: start=0, step=1, limit=4
    $region2: #{tpu_custom_call.1} parent=1 // loop_pre_header
      _
    $region3: #{tpu_custom_call.1} parent=1 // loop_header
      %s21 = sphi 0, %s25
      %p22 = scmp.ge.s32.totalorder %s21, 4
      %s31 = sphi 0, %s33
      %s34 = sphi 0, %s31
      %s35 = sphi 0, %s34
      %s51 = sphi 0, %s35
      %s55 = sphi 0, %s55
      %s57 = sphi 0, %s55
      %s58 = sphi 0, %s57
      %s72 = sphi 0, %s58
      %s76 = sphi 0, %s76
      %s78 = sphi 0, %s76
      %s79 = sphi 0, %s78
      %s93 = sphi 0, %s79
      %s97 = sphi 0, %s97
      %s99 = sphi 0, %s97
      %s100 = sphi 0, %s99
      %s114 = sphi 0, %s100
      %s118 = sphi 0, %s118
      %s120 = sphi 0, %s118
      %s121 = sphi 0, %s120
      %s135 = sphi 0, %s121
      %s139 = sphi 0, %s139
      %s141 = sphi 0, %s139
      %s142 = sphi 0, %s141
      %s156 = sphi 0, %s142
      %s160 = sphi 0, %s160
      %s162 = sphi 0, %s160
      %s163 = sphi 0, %s162
      %s177 = sphi 0, %s163
      %s183 = sphi 0, %s185
      %s186 = sphi 0, %s183
      %s187 = sphi 0, %s186
      %s203 = sphi 0, %s187
    $region4: #{tpu_custom_call.1} parent=1 // loop_header_branch
      %24 = sbr.rel (%p22) target = $region8
    $region5: #{tpu_custom_call.1} parent=1 // loop_body
      %s26 = ssub.s32 %s21, 1
      %s27 = ssub.s32 %s21, 2
      %s28 = sadd.s32 %s21, 1
      %s29 = ssub.s32 %s21, %s28
      %p30 = scmp.eq.s32.totalorder %s29, 0
      %s32 = sadd.s32 %s31, 1
      %s33 = scalar_select %p30, %s31, %s32
      %p36 = pneg %p30
      %p37 = scmp.eq.s32.totalorder %s21, 1
      %p38 = por %p36, %p37
      %p39 = scmp.ne.s32.totalorder %s31, %s34
      %p40 = scmp.eq.s32.totalorder %s21, 0
      %p41 = por %p39, %p40
      %p42 = scmp.ne.s32.totalorder %s31, %s34
      %p43 = scmp.eq.s32.totalorder %s26, 1
      %p44 = por %p42, %p43
      %p45 = scmp.ne.s32.totalorder %s34, %s35
      %p46 = scmp.eq.s32.totalorder %s26, 0
      %p47 = por %p45, %p46
      %p48 = scmp.ne.s32.totalorder %s34, %s35
      %p49 = scmp.eq.s32.totalorder %s27, 1
      %p50 = por %p48, %p49
      %p52 = scmp.ne.s32.totalorder %s35, %s51
      %p53 = scmp.eq.s32.totalorder %s27, 0
      %p54 = por %p52, %p53
      %s56 = sadd.s32 %s55, 1
      %p59 = scmp.eq.s32.totalorder %s21, 1
      %p60 = scmp.ne.s32.totalorder %s55, %s57
      %p61 = scmp.eq.s32.totalorder %s21, 0
      %p62 = por %p60, %p61
      %p63 = scmp.ne.s32.totalorder %s55, %s57
      %p64 = scmp.eq.s32.totalorder %s26, 1
      %p65 = por %p63, %p64
      %p66 = scmp.ne.s32.totalorder %s57, %s58
      %p67 = scmp.eq.s32.totalorder %s26, 0
      %p68 = por %p66, %p67
      %p69 = scmp.ne.s32.totalorder %s57, %s58
      %p70 = scmp.eq.s32.totalorder %s27, 1
      %p71 = por %p69, %p70
      %p73 = scmp.ne.s32.totalorder %s58, %s72
      %p74 = scmp.eq.s32.totalorder %s27, 0
      %p75 = por %p73, %p74
      %s77 = sadd.s32 %s76, 1
      %p80 = scmp.eq.s32.totalorder %s21, 1
      %p81 = scmp.ne.s32.totalorder %s76, %s78
      %p82 = scmp.eq.s32.totalorder %s21, 0
      %p83 = por %p81, %p82
      %p84 = scmp.ne.s32.totalorder %s76, %s78
      %p85 = scmp.eq.s32.totalorder %s26, 1
      %p86 = por %p84, %p85
      %p87 = scmp.ne.s32.totalorder %s78, %s79
      %p88 = scmp.eq.s32.totalorder %s26, 0
      %p89 = por %p87, %p88
      %p90 = scmp.ne.s32.totalorder %s78, %s79
      %p91 = scmp.eq.s32.totalorder %s27, 1
      %p92 = por %p90, %p91
      %p94 = scmp.ne.s32.totalorder %s79, %s93
      %p95 = scmp.eq.s32.totalorder %s27, 0
      %p96 = por %p94, %p95
      %s98 = sadd.s32 %s97, 1
      %p101 = scmp.eq.s32.totalorder %s21, 1
      %p102 = scmp.ne.s32.totalorder %s97, %s99
      %p103 = scmp.eq.s32.totalorder %s21, 0
      %p104 = por %p102, %p103
      %p105 = scmp.ne.s32.totalorder %s97, %s99
      %p106 = scmp.eq.s32.totalorder %s26, 1
      %p107 = por %p105, %p106
      %p108 = scmp.ne.s32.totalorder %s99, %s100
      %p109 = scmp.eq.s32.totalorder %s26, 0
      %p110 = por %p108, %p109
      %p111 = scmp.ne.s32.totalorder %s99, %s100
      %p112 = scmp.eq.s32.totalorder %s27, 1
      %p113 = por %p111, %p112
      %p115 = scmp.ne.s32.totalorder %s100, %s114
      %p116 = scmp.eq.s32.totalorder %s27, 0
      %p117 = por %p115, %p116
      %s119 = sadd.s32 %s118, 1
      %p122 = scmp.eq.s32.totalorder %s21, 1
      %p123 = scmp.ne.s32.totalorder %s118, %s120
      %p124 = scmp.eq.s32.totalorder %s21, 0
      %p125 = por %p123, %p124
      %p126 = scmp.ne.s32.totalorder %s118, %s120
      %p127 = scmp.eq.s32.totalorder %s26, 1
      %p128 = por %p126, %p127
      %p129 = scmp.ne.s32.totalorder %s120, %s121
      %p130 = scmp.eq.s32.totalorder %s26, 0
      %p131 = por %p129, %p130
      %p132 = scmp.ne.s32.totalorder %s120, %s121
      %p133 = scmp.eq.s32.totalorder %s27, 1
      %p134 = por %p132, %p133
      %p136 = scmp.ne.s32.totalorder %s121, %s135
      %p137 = scmp.eq.s32.totalorder %s27, 0
      %p138 = por %p136, %p137
      %s140 = sadd.s32 %s139, 1
      %p143 = scmp.eq.s32.totalorder %s21, 1
      %p144 = scmp.ne.s32.totalorder %s139, %s141
      %p145 = scmp.eq.s32.totalorder %s21, 0
      %p146 = por %p144, %p145
      %p147 = scmp.ne.s32.totalorder %s139, %s141
      %p148 = scmp.eq.s32.totalorder %s26, 1
      %p149 = por %p147, %p148
      %p150 = scmp.ne.s32.totalorder %s141, %s142
      %p151 = scmp.eq.s32.totalorder %s26, 0
      %p152 = por %p150, %p151
      %p153 = scmp.ne.s32.totalorder %s141, %s142
      %p154 = scmp.eq.s32.totalorder %s27, 1
      %p155 = por %p153, %p154
      %p157 = scmp.ne.s32.totalorder %s142, %s156
      %p158 = scmp.eq.s32.totalorder %s27, 0
      %p159 = por %p157, %p158
      %s161 = sadd.s32 %s160, 1
      %p164 = scmp.eq.s32.totalorder %s21, 1
      %p165 = scmp.ne.s32.totalorder %s160, %s162
      %p166 = scmp.eq.s32.totalorder %s21, 0
      %p167 = por %p165, %p166
      %p168 = scmp.ne.s32.totalorder %s160, %s162
      %p169 = scmp.eq.s32.totalorder %s26, 1
      %p170 = por %p168, %p169
      %p171 = scmp.ne.s32.totalorder %s162, %s163
      %p172 = scmp.eq.s32.totalorder %s26, 0
      %p173 = por %p171, %p172
      %p174 = scmp.ne.s32.totalorder %s162, %s163
      %p175 = scmp.eq.s32.totalorder %s27, 1
      %p176 = por %p174, %p175
      %p178 = scmp.ne.s32.totalorder %s163, %s177
      %p179 = scmp.eq.s32.totalorder %s27, 0
      %p180 = por %p178, %p179
      %s181 = ssub.s32 %s21, %s28
      %p182 = scmp.eq.s32.totalorder %s181, 0
      %s184 = sadd.s32 %s183, 1
      %s185 = scalar_select %p182, %s183, %s184
      %p188 = pneg %p182
      %p189 = scmp.eq.s32.totalorder %s21, 1
      %p190 = por %p188, %p189
      %p191 = scmp.ne.s32.totalorder %s183, %s186
      %p192 = scmp.eq.s32.totalorder %s21, 0
      %p193 = por %p191, %p192
      %p194 = scmp.ne.s32.totalorder %s183, %s186
      %p195 = scmp.eq.s32.totalorder %s26, 1
      %p196 = por %p194, %p195
      %p197 = scmp.ne.s32.totalorder %s186, %s187
      %p198 = scmp.eq.s32.totalorder %s26, 0
      %p199 = por %p197, %p198
      %p200 = scmp.ne.s32.totalorder %s186, %s187
      %p201 = scmp.eq.s32.totalorder %s27, 1
      %p202 = por %p200, %p201
      %p204 = scmp.ne.s32.totalorder %s187, %s203
      %p205 = scmp.eq.s32.totalorder %s27, 0
      %p206 = por %p204, %p205
      %p207 = scmp.le.s32.totalorder 1, %s21
      %p208 = scmp.lt.s32.totalorder %s21, 3
      %p209 = pnand %p207, %p208
      %p210 = pneg %p209
      // Predicated region
      $region9: #{tpu_custom_call.1} parent=5 // pred_check
        _
      $region10: #{tpu_custom_call.1} parent=5 // pred_check_branch
        %212 = sbr.rel (%p209) target = $region12
      $region11: #{tpu_custom_call.1} parent=5 // pred_region
        %s213 = ssub.s32 %s21, 1
        // Predicated region
        $region13: #{tpu_custom_call.1} parent=11 // pred_check
          %p214 = pneg %p68
        $region14: #{tpu_custom_call.1} parent=11 // pred_check_branch
          %216 = sbr.rel (%p214) target = $region16
        $region15: #{tpu_custom_call.1} parent=11 // pred_region
          %s218 = ssub.s32 128, 128
          %219 = vsyncadd [#allocation6], %s218
          %s220 = sshll.u32 [#allocation5], 4
          %s221 = int_to_ptr.vmem [resolvable:$true] %s220
          %226 = dma.hbm_to_vmem [thread:$0]  %s1, 128, %s221, [#allocation6], 64, 64, 4
        $region16: #{tpu_custom_call.1} parent=11 // pred_fallthru
          _
        // Predicated region
        $region17: #{tpu_custom_call.1} parent=11 // pred_check
          %p227 = pneg %p89
        $region18: #{tpu_custom_call.1} parent=11 // pred_check_branch
          %229 = sbr.rel (%p227) target = $region20
        $region19: #{tpu_custom_call.1} parent=11 // pred_region
          _
        $region20: #{tpu_custom_call.1} parent=11 // pred_fallthru
          _
        // Predicated region
        $region21: #{tpu_custom_call.1} parent=11 // pred_check
          %p230 = pneg %p110
        $region22: #{tpu_custom_call.1} parent=11 // pred_check_branch
          %232 = sbr.rel (%p230) target = $region24
        $region23: #{tpu_custom_call.1} parent=11 // pred_region
          %s234 = ssub.s32 1024, 1024
          %235 = vsyncadd [#allocation6], %s234
          %s236 = sshll.u32 [#allocation7], 4
          %s237 = int_to_ptr.vmem [resolvable:$true] %s236
          %242 = dma.hbm_to_vmem [thread:$0]  %s3, 1024, %s237, [#allocation6], 64, 64, 4
        $region24: #{tpu_custom_call.1} parent=11 // pred_fallthru
          _
        // Predicated region
        $region25: #{tpu_custom_call.1} parent=11 // pred_check
          %p243 = pneg %p131
        $region26: #{tpu_custom_call.1} parent=11 // pred_check_branch
          %245 = sbr.rel (%p243) target = $region28
        $region27: #{tpu_custom_call.1} parent=11 // pred_region
          _
        $region28: #{tpu_custom_call.1} parent=11 // pred_fallthru
          _
        // Predicated region
        $region29: #{tpu_custom_call.1} parent=11 // pred_check
          %p246 = pneg %p152
        $region30: #{tpu_custom_call.1} parent=11 // pred_check_branch
          %248 = sbr.rel (%p246) target = $region32
        $region31: #{tpu_custom_call.1} parent=11 // pred_region
          %s250 = ssub.s32 1024, 1024
          %251 = vsyncadd [#allocation9], %s250
          %s252 = sshll.u32 [#allocation8], 4
          %s253 = int_to_ptr.vmem [resolvable:$true] %s252
          %258 = dma.hbm_to_vmem [thread:$0]  %s5, 1024, %s253, [#allocation9], 64, 64, 4
        $region32: #{tpu_custom_call.1} parent=11 // pred_fallthru
          _
        // Predicated region
        $region33: #{tpu_custom_call.1} parent=11 // pred_check
          %p259 = pneg %p173
        $region34: #{tpu_custom_call.1} parent=11 // pred_check_branch
          %261 = sbr.rel (%p259) target = $region36
        $region35: #{tpu_custom_call.1} parent=11 // pred_region
          _
        $region36: #{tpu_custom_call.1} parent=11 // pred_fallthru
          _
      $region12: #{tpu_custom_call.1} parent=5 // pred_fallthru
        _
      %p262 = scmp.lt.s32.totalorder %s21, 2
      // Predicated region
      $region37: #{tpu_custom_call.1} parent=5 // pred_check
        %p263 = pneg %p262
      $region38: #{tpu_custom_call.1} parent=5 // pred_check_branch
        %265 = sbr.rel (%p263) target = $region40
      $region39: #{tpu_custom_call.1} parent=5 // pred_region
        // Predicated region
        $region41: #{tpu_custom_call.1} parent=39 // pred_check
          %p266 = pneg %p41
        $region42: #{tpu_custom_call.1} parent=39 // pred_check_branch
          %268 = sbr.rel (%p266) target = $region44
        $region43: #{tpu_custom_call.1} parent=39 // pred_region
          %s269 = sand.u32 %s31, 1
          %s270 = scalar_lea.sflag [#allocation3], %s269
          %s271 = sand.u32 %s31, 1
          %s272 = smul.addr %s271, 8
          %s273 = scalar_lea.vmem [#allocation2], %s272
          %s275 = ssub.s32 128, 128
          %276 = vsyncadd %s270, %s275
          %s277 = smul.addr %s21, 128
          %s278 = scalar_lea.hbm %s0, %s277
          %s280 = sshll.u32 %s273, 4
          %s281 = int_to_ptr.vmem [resolvable:$true] %s280
          %283 = dma.hbm_to_vmem [thread:$0]  %s278, 128, %s281, %s270
        $region44: #{tpu_custom_call.1} parent=39 // pred_fallthru
          _
      $region40: #{tpu_custom_call.1} parent=5 // pred_fallthru
        _
      %p284 = scmp.le.s32.totalorder 1, %s21
      %p285 = scmp.lt.s32.totalorder %s21, 3
      %p286 = pnand %p284, %p285
      %p287 = pneg %p286
      // Predicated region
      $region45: #{tpu_custom_call.1} parent=5 // pred_check
        _
      $region46: #{tpu_custom_call.1} parent=5 // pred_check_branch
        %289 = sbr.rel (%p286) target = $region48
      $region47: #{tpu_custom_call.1} parent=5 // pred_region
        %s290 = ssub.s32 %s21, 1
        %s291 = sand.u32 %s34, 1
        %s292 = scalar_lea.sflag [#allocation3], %s291
        %s293 = sand.u32 %s34, 1
        %s294 = smul.addr %s293, 8
        %s295 = scalar_lea.vmem [#allocation2], %s294
        // Predicated region
        $region49: #{tpu_custom_call.1} parent=47 // pred_check
          %p296 = pneg %p47
        $region50: #{tpu_custom_call.1} parent=47 // pred_check_branch
          %298 = sbr.rel (%p296) target = $region52
        $region51: #{tpu_custom_call.1} parent=47 // pred_region
          %299 = dma.done %s292, 128
        $region52: #{tpu_custom_call.1} parent=47 // pred_fallthru
          _
        // Predicated region
        $region53: #{tpu_custom_call.1} parent=47 // pred_check
          %p300 = pneg %p68
        $region54: #{tpu_custom_call.1} parent=47 // pred_check_branch
          %302 = sbr.rel (%p300) target = $region56
        $region55: #{tpu_custom_call.1} parent=47 // pred_region
          %303 = dma.done [#allocation6], 128
        $region56: #{tpu_custom_call.1} parent=47 // pred_fallthru
          _
        // Predicated region
        $region57: #{tpu_custom_call.1} parent=47 // pred_check
          %p304 = pneg %p110
        $region58: #{tpu_custom_call.1} parent=47 // pred_check_branch
          %306 = sbr.rel (%p304) target = $region60
        $region59: #{tpu_custom_call.1} parent=47 // pred_region
          %307 = dma.done [#allocation6], 1024
        $region60: #{tpu_custom_call.1} parent=47 // pred_fallthru
          _
        // Predicated region
        $region61: #{tpu_custom_call.1} parent=47 // pred_check
          %p308 = pneg %p152
        $region62: #{tpu_custom_call.1} parent=47 // pred_check_branch
          %310 = sbr.rel (%p308) target = $region64
        $region63: #{tpu_custom_call.1} parent=47 // pred_region
          %311 = dma.done [#allocation9], 1024
        $region64: #{tpu_custom_call.1} parent=47 // pred_fallthru
          _
        %s312 = sand.u32 %s34, 1
        %s313 = scalar_lea.sflag [#allocation3], %s312
        %s314 = sand.u32 %s34, 1
        %s315 = smul.addr %s314, 8
        %s316 = scalar_lea.vmem [#allocation2], %s315
        %p317 = pneg %p47
        %p318 = pneg %p44
        %p319 = pneg %p68
        %p320 = pneg %p65
        %p321 = pneg %p89
        %p322 = pneg %p86
        %p323 = pneg %p110
        %p324 = pneg %p107
        %p325 = pneg %p131
        %p326 = pneg %p128
        %p327 = pneg %p152
        %p328 = pneg %p149
        %p329 = pneg %p173
        %p330 = pneg %p170
        %p331 = pneg %p199
        %p332 = pneg %p196
        %s333 = sand.u32 %s186, 1
        %s334 = scalar_lea.sflag [#allocation4], %s333
        %s335 = sand.u32 %s186, 1
        %s336 = smul.addr %s335, 4
        %s337 = scalar_lea.vmem [#allocation10], %s336
        %v339 = vld [vmem:[%s295] sm:$0xff]
        %v340 = vpack.c.bf16 %v339, %v339
        %v341 = vld [vmem:[#allocation5] sm:$0xf]
        %v342 = vld [vmem:[#allocation5 + $0x4] sm:$0x3]
        %v343 = vld [vmem:[%s2] sm:$0x1]
        %v345 = vlaneseq
        %v346 = vshrl.u32 %v345, 7
        %v347 = vsub.s32 0, %v346
        %v348 = vrot.slane %v343, %v347
        %v352 = vunpack.c.l.b16 %v341
        %v353 = vunpack.c.l.b16 %v342
        %v354 = vpack.c.b16 %v353, %v352
        %vm355 = vcmask 97280
        %v357 = vsel %vm355, %v340, 0
        %vm359 = vcmask 1045504
        %v361 = vsel %vm359, %v354, 0
        %363 = vmatprep.subr.bf16.mxu0 0
        %364 = vmatpush1.bf16.msra.mxu0 %v361
        %365 = vmatprep.subr.bf16.mxu0 0
        %366 = vmatpush1.bf16.msra.mxu0 0
        %367 = vmatprep.subr.bf16.mxu0 0
        %368 = vmatpush1.bf16.msra.mxu0 0
        %369 = vmatprep.subr.bf16.mxu0 0
        %370 = vmatpush1.bf16.msra.mxu0 0
        %371 = vmatprep.subr.bf16.mxu0 0
        %372 = vmatpush1.bf16.msra.mxu0 0
        %373 = vmatprep.subr.bf16.mxu0 0
        %374 = vmatpush1.bf16.msra.mxu0 0
        %375 = vmatprep.subr.bf16.mxu0 0
        %376 = vmatpush1.bf16.msra.mxu0 0
        %377 = vmatprep.subr.bf16.mxu0 0
        %378 = vmatpush1.bf16.msra.mxu0 0
        %379 = vmatprep.subr.bf16.mxu0 0
        %380 = vmatpush1.bf16.msra.mxu0 0
        %381 = vmatprep.subr.bf16.mxu0 0
        %382 = vmatpush1.bf16.msra.mxu0 0
        %383 = vmatprep.subr.bf16.mxu0 0
        %384 = vmatpush1.bf16.msra.mxu0 0
        %385 = vmatprep.subr.bf16.mxu0 0
        %386 = vmatpush1.bf16.msra.mxu0 0
        %387 = vmatprep.subr.bf16.mxu0 0
        %388 = vmatpush1.bf16.msra.mxu0 0
        %389 = vmatprep.subr.bf16.mxu0 0
        %390 = vmatpush1.bf16.msra.mxu0 0
        %391 = vmatprep.subr.bf16.mxu0 0
        %392 = vmatpush1.bf16.msra.mxu0 0
        %393 = vmatprep.subr.bf16.mxu0 0
        %394 = vmatpush1.bf16.msra.mxu0 0
        %395 = vmatprep.mubr.bf16.mxu0 0
        %396 = vmatmul.mubr.bf16.gmra.mrb[0].mxu0 %v357
        %v397 = vpop.f32.mrb[0].mxu0
        %v398 = vadd.f32 %v348, %v397
        %v399 = vpop.f32.mrb[0].mxu0
        %v400 = vpop.f32.mrb[0].mxu0
        %v401 = vpop.f32.mrb[0].mxu0
        %402 = vdwg.mxu0
        %v403 = vmax.f32 %v398, 0.0
        %v404 = vpack.c.bf16 %v403, %v403
        %v405 = vld [vmem:[#allocation7] sm:$0xf]
        %v406 = vld [vmem:[#allocation7 + $0x4] sm:$0xf]
        %v407 = vld [vmem:[#allocation7 + $0x8] sm:$0xf]
        %v408 = vld [vmem:[#allocation7 + $0xc] sm:$0xf]
        %v409 = vld [vmem:[#allocation7 + $0x10] sm:$0xf]
        %v410 = vld [vmem:[#allocation7 + $0x14] sm:$0xf]
        %v411 = vld [vmem:[#allocation7 + $0x18] sm:$0xf]
        %v412 = vld [vmem:[#allocation7 + $0x1c] sm:$0xf]
        %v413 = vld [vmem:[#allocation7 + $0x20] sm:$0xf]
        %v414 = vld [vmem:[#allocation7 + $0x24] sm:$0xf]
        %v415 = vld [vmem:[#allocation7 + $0x28] sm:$0xf]
        %v416 = vld [vmem:[#allocation7 + $0x2c] sm:$0xf]
        %v417 = vld [vmem:[#allocation7 + $0x30] sm:$0xf]
        %v418 = vld [vmem:[#allocation7 + $0x34] sm:$0xf]
        %v419 = vld [vmem:[#allocation7 + $0x38] sm:$0xf]
        %v420 = vld [vmem:[#allocation7 + $0x3c] sm:$0xf]
        %v421 = vld [vmem:[%s4] sm:$0x1]
        %v423 = vlaneseq
        %v424 = vshrl.u32 %v423, 7
        %v425 = vsub.s32 0, %v424
        %v426 = vrot.slane %v421, %v425
        %v444 = vunpack.c.l.b16 %v405
        %v445 = vunpack.c.l.b16 %v406
        %v446 = vunpack.c.l.b16 %v407
        %v447 = vunpack.c.l.b16 %v408
        %v448 = vunpack.c.l.b16 %v409
        %v449 = vunpack.c.l.b16 %v410
        %v450 = vunpack.c.l.b16 %v411
        %v451 = vunpack.c.l.b16 %v412
        %v452 = vunpack.c.l.b16 %v413
        %v453 = vunpack.c.l.b16 %v414
        %v454 = vunpack.c.l.b16 %v415
        %v455 = vunpack.c.l.b16 %v416
        %v456 = vunpack.c.l.b16 %v417
        %v457 = vunpack.c.l.b16 %v418
        %v458 = vunpack.c.l.b16 %v419
        %v459 = vunpack.c.l.b16 %v420
        %v460 = vpack.c.b16 %v445, %v444
        %v461 = vpack.c.b16 %v447, %v446
        %v462 = vpack.c.b16 %v449, %v448
        %v463 = vpack.c.b16 %v451, %v450
        %v464 = vpack.c.b16 %v453, %v452
        %v465 = vpack.c.b16 %v455, %v454
        %v466 = vpack.c.b16 %v457, %v456
        %v467 = vpack.c.b16 %v459, %v458
        %476 = vmatprep.subr.bf16.mxu0 0
        %477 = vmatpush1.bf16.msra.mxu0 %v460
        %478 = vmatprep.subr.bf16.mxu0 0
        %479 = vmatpush1.bf16.msra.mxu0 %v461
        %480 = vmatprep.subr.bf16.mxu0 0
        %481 = vmatpush1.bf16.msra.mxu0 %v462
        %482 = vmatprep.subr.bf16.mxu0 0
        %483 = vmatpush1.bf16.msra.mxu0 %v463
        %484 = vmatprep.subr.bf16.mxu0 0
        %485 = vmatpush1.bf16.msra.mxu0 %v464
        %486 = vmatprep.subr.bf16.mxu0 0
        %487 = vmatpush1.bf16.msra.mxu0 %v465
        %488 = vmatprep.subr.bf16.mxu0 0
        %489 = vmatpush1.bf16.msra.mxu0 %v466
        %490 = vmatprep.subr.bf16.mxu0 0
        %491 = vmatpush1.bf16.msra.mxu0 %v467
        %492 = vmatprep.subr.bf16.mxu0 0
        %493 = vmatpush1.bf16.msra.mxu0 0
        %494 = vmatprep.subr.bf16.mxu0 0
        %495 = vmatpush1.bf16.msra.mxu0 0
        %496 = vmatprep.subr.bf16.mxu0 0
        %497 = vmatpush1.bf16.msra.mxu0 0
        %498 = vmatprep.subr.bf16.mxu0 0
        %499 = vmatpush1.bf16.msra.mxu0 0
        %500 = vmatprep.subr.bf16.mxu0 0
        %501 = vmatpush1.bf16.msra.mxu0 0
        %502 = vmatprep.subr.bf16.mxu0 0
        %503 = vmatpush1.bf16.msra.mxu0 0
        %504 = vmatprep.subr.bf16.mxu0 0
        %505 = vmatpush1.bf16.msra.mxu0 0
        %506 = vmatprep.subr.bf16.mxu0 0
        %507 = vmatpush1.bf16.msra.mxu0 0
        %508 = vmatprep.mubr.bf16.mxu0 0
        %509 = vmatmul.mubr.bf16.gmra.mrb[0].mxu0 %v404
        %v510 = vpop.f32.mrb[0].mxu0
        %v511 = vadd.f32 %v426, %v510
        %v512 = vpop.f32.mrb[0].mxu0
        %v513 = vpop.f32.mrb[0].mxu0
        %v514 = vpop.f32.mrb[0].mxu0
        %515 = vdwg.mxu0
        %v516 = vmax.f32 %v511, 0.0
        %v517 = vpack.c.bf16 %v516, %v516
        %v518 = vld [vmem:[#allocation8] sm:$0xf]
        %v519 = vld [vmem:[#allocation8 + $0x4] sm:$0xf]
        %v520 = vld [vmem:[#allocation8 + $0x8] sm:$0xf]
        %v521 = vld [vmem:[#allocation8 + $0xc] sm:$0xf]
        %v522 = vld [vmem:[#allocation8 + $0x10] sm:$0xf]
        %v523 = vld [vmem:[#allocation8 + $0x14] sm:$0xf]
        %v524 = vld [vmem:[#allocation8 + $0x18] sm:$0xf]
        %v525 = vld [vmem:[#allocation8 + $0x1c] sm:$0xf]
        %v526 = vld [vmem:[#allocation8 + $0x20] sm:$0xf]
        %v527 = vld [vmem:[#allocation8 + $0x24] sm:$0xf]
        %v528 = vld [vmem:[#allocation8 + $0x28] sm:$0xf]
        %v529 = vld [vmem:[#allocation8 + $0x2c] sm:$0xf]
        %v530 = vld [vmem:[#allocation8 + $0x30] sm:$0xf]
        %v531 = vld [vmem:[#allocation8 + $0x34] sm:$0xf]
        %v532 = vld [vmem:[#allocation8 + $0x38] sm:$0xf]
        %v533 = vld [vmem:[#allocation8 + $0x3c] sm:$0xf]
        %v534 = vld [vmem:[%s6] sm:$0x1]
        %v536 = vlaneseq
        %v537 = vshrl.u32 %v536, 7
        %v538 = vsub.s32 0, %v537
        %v539 = vrot.slane %v534, %v538
        %v557 = vunpack.c.l.b16 %v518
        %v558 = vunpack.c.l.b16 %v519
        %v559 = vunpack.c.l.b16 %v520
        %v560 = vunpack.c.l.b16 %v521
        %v561 = vunpack.c.l.b16 %v522
        %v562 = vunpack.c.l.b16 %v523
        %v563 = vunpack.c.l.b16 %v524
        %v564 = vunpack.c.l.b16 %v525
        %v565 = vunpack.c.l.b16 %v526
        %v566 = vunpack.c.l.b16 %v527
        %v567 = vunpack.c.l.b16 %v528
        %v568 = vunpack.c.l.b16 %v529
        %v569 = vunpack.c.l.b16 %v530
        %v570 = vunpack.c.l.b16 %v531
        %v571 = vunpack.c.l.b16 %v532
        %v572 = vunpack.c.l.b16 %v533
        %v573 = vpack.c.b16 %v558, %v557
        %v574 = vpack.c.b16 %v560, %v559
        %v575 = vpack.c.b16 %v562, %v561
        %v576 = vpack.c.b16 %v564, %v563
        %v577 = vpack.c.b16 %v566, %v565
        %v578 = vpack.c.b16 %v568, %v567
        %v579 = vpack.c.b16 %v570, %v569
        %v580 = vpack.c.b16 %v572, %v571
        %589 = vmatprep.subr.bf16.mxu0 0
        %590 = vmatpush1.bf16.msra.mxu0 %v573
        %591 = vmatprep.subr.bf16.mxu0 0
        %592 = vmatpush1.bf16.msra.mxu0 %v574
        %593 = vmatprep.subr.bf16.mxu0 0
        %594 = vmatpush1.bf16.msra.mxu0 %v575
        %595 = vmatprep.subr.bf16.mxu0 0
        %596 = vmatpush1.bf16.msra.mxu0 %v576
        %597 = vmatprep.subr.bf16.mxu0 0
        %598 = vmatpush1.bf16.msra.mxu0 %v577
        %599 = vmatprep.subr.bf16.mxu0 0
        %600 = vmatpush1.bf16.msra.mxu0 %v578
        %601 = vmatprep.subr.bf16.mxu0 0
        %602 = vmatpush1.bf16.msra.mxu0 %v579
        %603 = vmatprep.subr.bf16.mxu0 0
        %604 = vmatpush1.bf16.msra.mxu0 %v580
        %605 = vmatprep.subr.bf16.mxu0 0
        %606 = vmatpush1.bf16.msra.mxu0 0
        %607 = vmatprep.subr.bf16.mxu0 0
        %608 = vmatpush1.bf16.msra.mxu0 0
        %609 = vmatprep.subr.bf16.mxu0 0
        %610 = vmatpush1.bf16.msra.mxu0 0
        %611 = vmatprep.subr.bf16.mxu0 0
        %612 = vmatpush1.bf16.msra.mxu0 0
        %613 = vmatprep.subr.bf16.mxu0 0
        %614 = vmatpush1.bf16.msra.mxu0 0
        %615 = vmatprep.subr.bf16.mxu0 0
        %616 = vmatpush1.bf16.msra.mxu0 0
        %617 = vmatprep.subr.bf16.mxu0 0
        %618 = vmatpush1.bf16.msra.mxu0 0
        %619 = vmatprep.subr.bf16.mxu0 0
        %620 = vmatpush1.bf16.msra.mxu0 0
        %621 = vmatprep.mubr.bf16.mxu0 0
        %622 = vmatmul.mubr.bf16.gmra.mrb[0].mxu0 %v517
        %v623 = vpop.f32.mrb[0].mxu0
        %v624 = vadd.f32 %v539, %v623
        %v625 = vpop.f32.mrb[0].mxu0
        %v626 = vpop.f32.mrb[0].mxu0
        %v627 = vpop.f32.mrb[0].mxu0
        %628 = vdwg.mxu0
        %v629 = vpack.c.bf16 %v624, %v624
        %630 = vst [vmem:[%s337] sm:$0xf] %v629
        %s631 = sand.u32 %s186, 1
        %s632 = scalar_lea.sflag [#allocation4], %s631
        %s633 = sand.u32 %s186, 1
        %s634 = smul.addr %s633, 4
        %s635 = scalar_lea.vmem [#allocation10], %s634
        // Predicated region
        $region65: #{tpu_custom_call.1} parent=47 // pred_check
          %p636 = pneg %p196
        $region66: #{tpu_custom_call.1} parent=47 // pred_check_branch
          %638 = sbr.rel (%p636) target = $region68
        $region67: #{tpu_custom_call.1} parent=47 // pred_region
          %s640 = ssub.s32 64, 64
          %641 = vsyncadd %s632, %s640
          %s642 = smul.addr %s26, 64
          %s643 = scalar_lea.hbm %s7, %s642
          %s645 = sshll.u32 %s635, 4
          %s646 = int_to_ptr.vmem [resolvable:$true] %s645
          %648 = dma.vmem_to_hbm [thread:$0]  %s646, 64, %s643, %s632
        $region68: #{tpu_custom_call.1} parent=47 // pred_fallthru
          _
      $region48: #{tpu_custom_call.1} parent=5 // pred_fallthru
        _
      %p649 = scmp.le.s32.totalorder 2, %s21
      // Predicated region
      $region69: #{tpu_custom_call.1} parent=5 // pred_check
        %p650 = pneg %p649
      $region70: #{tpu_custom_call.1} parent=5 // pred_check_branch
        %652 = sbr.rel (%p650) target = $region72
      $region71: #{tpu_custom_call.1} parent=5 // pred_region
        %s653 = ssub.s32 %s21, 2
        // Predicated region
        $region73: #{tpu_custom_call.1} parent=71 // pred_check
          %p654 = pneg %p202
        $region74: #{tpu_custom_call.1} parent=71 // pred_check_branch
          %656 = sbr.rel (%p654) target = $region76
        $region75: #{tpu_custom_call.1} parent=71 // pred_region
          %s657 = sand.u32 %s187, 1
          %s658 = scalar_lea.sflag [#allocation4], %s657
          %s659 = sand.u32 %s187, 1
          %s660 = smul.addr %s659, 4
          %s661 = scalar_lea.vmem [#allocation10], %s660
          %662 = dma.done %s658, 64
        $region76: #{tpu_custom_call.1} parent=71 // pred_fallthru
          _
      $region72: #{tpu_custom_call.1} parent=5 // pred_fallthru
        _
    $region6: #{tpu_custom_call.1} parent=1 // loop_footer
      %s25 = sadd.s32 1, %s21
    $region7: #{tpu_custom_call.1} parent=1 // loop_footer_branch
      %20 = sbr.rel target = $region3
    $region8: #{tpu_custom_call.1} parent=1 // loop_exit
      _
    %663 = vsyncpa [#allocation3], 1
    %s664 = scalar_lea.sflag [#allocation3], 1
    %665 = vsyncpa %s664, 1
    %666 = vsyncpa [#allocation6], 1
    %667 = vsyncpa [#allocation9], 1
    %668 = vsyncpa [#allocation4], 1
    %s669 = scalar_lea.sflag [#allocation4], 1
    %670 = vsyncpa %s669, 1

// kernel: tpu_custom_call.1
$region0: #{tpu_custom_call.1}
  #allocation0 [shape = 'u32[]', space=smem, size = 0x4, offset = 0x4, fixed_abs, tag = 'smem constant byte address 0x4 - core index']
  #allocation1 [shape = 'u32[144,128]{1,0:T(1,128)}', space=vmem, size = 0x12000, scoped, tag = 'internal scratch']
  %s0 = inlined_call_operand.hbm [shape: f32[16,12], index: 0, kind: input, shape index: {}]
  %s1 = inlined_call_operand.hbm [shape: bf16[12,128], index: 1, kind: input, shape index: {}]
  %s2 = inlined_call_operand.vmem [shape: f32[1,128], index: 2, kind: input, shape index: {}]
  %s3 = inlined_call_operand.hbm [shape: bf16[128,128], index: 3, kind: input, shape index: {}]
  %s4 = inlined_call_operand.vmem [shape: f32[1,128], index: 4, kind: input, shape index: {}]
  %s5 = inlined_call_operand.hbm [shape: bf16[128,128], index: 5, kind: input, shape index: {}]
  %s6 = inlined_call_operand.vmem [shape: f32[1,128], index: 6, kind: input, shape index: {}]
  %s7 = inlined_call_operand.hbm [shape: bf16[16,128], index: 7, kind: output, shape index: {}]
  %s8 = sld [smem:[#allocation0]]
  $region77: #{tpu_custom_call.1} parent=0
    _
  %s10 = ssub.s32 1, %s8
  %s11 = scalar_select 0, %s10, %s8
  $region1: #{tpu_custom_call.1} parent=0
    #allocation2 [shape = 'u8[8192]{0}', space=vmem, size = 0x2000, scoped, tag = 'input window, operand 0']
    #allocation3 [shape = 's32[2]{0}', space=sflag, size = 0x8, scoped, tag = 'scoped memory for tpu_custom_call.1']
    #allocation4 [shape = 's32[2]{0}', space=sflag, size = 0x8, scoped, tag = 'scoped memory for tpu_custom_call.1']
    #allocation5 [shape = 'u8[4096]{0}', space=vmem, size = 0x1000, scoped, tag = 'input window, operand 1, single buffered']
    #allocation6 [shape = 's32[1]{0}', space=sflag, size = 0x4, scoped, tag = 'scoped memory for tpu_custom_call.1']
    #allocation7 [shape = 'u8[32768]{0}', space=vmem, size = 0x8000, scoped, tag = 'input window, operand 3, single buffered']
    #allocation8 [shape = 'u8[32768]{0}', space=vmem, size = 0x8000, scoped, tag = 'input window, operand 5, single buffered']
    #allocation9 [shape = 's32[1]{0}', space=sflag, size = 0x4, scoped, tag = 'scoped memory for tpu_custom_call.1']
    #allocation10 [shape = 'u8[4096]{0}', space=vmem, size = 0x1000, scoped, tag = 'output window, operand 0']
    %12 = vsyncpa [#allocation3], 0
    %s13 = scalar_lea.sflag [#allocation3], 1
    %14 = vsyncpa %s13, 0
    %15 = vsyncpa [#allocation6], 0
    %16 = vsyncpa [#allocation9], 0
    %17 = vsyncpa [#allocation4], 0
    %s18 = scalar_lea.sflag [#allocation4], 1
    %19 = vsyncpa %s18, 0
    loop: start=0, step=1, limit=4
    $region2: #{tpu_custom_call.1} parent=1 // loop_pre_header
      _
    $region3: #{tpu_custom_call.1} parent=1 // loop_header
      %s21 = sphi 0, %s25
      %p22 = scmp.ge.s32.totalorder %s21, 4
      %s31 = sphi 0, %s33
      %s34 = sphi 0, %s31
      %s35 = sphi 0, %s34
      %s51 = sphi 0, %s35
      %s55 = sphi 0, %s55
      %s57 = sphi 0, %s55
      %s58 = sphi 0, %s57
      %s72 = sphi 0, %s58
      %s76 = sphi 0, %s76
      %s78 = sphi 0, %s76
      %s79 = sphi 0, %s78
      %s93 = sphi 0, %s79
      %s97 = sphi 0, %s97
      %s99 = sphi 0, %s97
      %s100 = sphi 0, %s99
      %s114 = sphi 0, %s100
      %s118 = sphi 0, %s118
      %s120 = sphi 0, %s118
      %s121 = sphi 0, %s120
      %s135 = sphi 0, %s121
      %s139 = sphi 0, %s139
      %s141 = sphi 0, %s139
      %s142 = sphi 0, %s141
      %s156 = sphi 0, %s142
      %s160 = sphi 0, %s160
      %s162 = sphi 0, %s160
      %s163 = sphi 0, %s162
      %s177 = sphi 0, %s163
      %s183 = sphi 0, %s185
      %s186 = sphi 0, %s183
      %s187 = sphi 0, %s186
      %s203 = sphi 0, %s187
    $region4: #{tpu_custom_call.1} parent=1 // loop_header_branch
      %24 = sbr.rel (%p22) target = $region8
    $region5: #{tpu_custom_call.1} parent=1 // loop_body
      %s26 = ssub.s32 %s21, 1
      %s27 = ssub.s32 %s21, 2
      %s28 = sadd.s32 %s21, 1
      %s29 = ssub.s32 %s21, %s28
      %p30 = scmp.eq.s32.totalorder %s29, 0
      %s32 = sadd.s32 %s31, 1
      %s33 = scalar_select %p30, %s31, %s32
      %p36 = pneg %p30
      %p37 = scmp.eq.s32.totalorder %s21, 1
      %p38 = por %p36, %p37
      %p39 = scmp.ne.s32.totalorder %s31, %s34
      %p40 = scmp.eq.s32.totalorder %s21, 0
      %p41 = por %p39, %p40
      %p42 = scmp.ne.s32.totalorder %s31, %s34
      %p43 = scmp.eq.s32.totalorder %s26, 1
      %p44 = por %p42, %p43
      %p45 = scmp.ne.s32.totalorder %s34, %s35
      %p46 = scmp.eq.s32.totalorder %s26, 0
      %p47 = por %p45, %p46
      %p48 = scmp.ne.s32.totalorder %s34, %s35
      %p49 = scmp.eq.s32.totalorder %s27, 1
      %p50 = por %p48, %p49
      %p52 = scmp.ne.s32.totalorder %s35, %s51
      %p53 = scmp.eq.s32.totalorder %s27, 0
      %p54 = por %p52, %p53
      %s56 = sadd.s32 %s55, 1
      %p59 = scmp.eq.s32.totalorder %s21, 1
      %p60 = scmp.ne.s32.totalorder %s55, %s57
      %p61 = scmp.eq.s32.totalorder %s21, 0
      %p62 = por %p60, %p61
      %p63 = scmp.ne.s32.totalorder %s55, %s57
      %p64 = scmp.eq.s32.totalorder %s26, 1
      %p65 = por %p63, %p64
      %p66 = scmp.ne.s32.totalorder %s57, %s58
      %p67 = scmp.eq.s32.totalorder %s26, 0
      %p68 = por %p66, %p67
      %p69 = scmp.ne.s32.totalorder %s57, %s58
      %p70 = scmp.eq.s32.totalorder %s27, 1
      %p71 = por %p69, %p70
      %p73 = scmp.ne.s32.totalorder %s58, %s72
      %p74 = scmp.eq.s32.totalorder %s27, 0
      %p75 = por %p73, %p74
      %s77 = sadd.s32 %s76, 1
      %p80 = scmp.eq.s32.totalorder %s21, 1
      %p81 = scmp.ne.s32.totalorder %s76, %s78
      %p82 = scmp.eq.s32.totalorder %s21, 0
      %p83 = por %p81, %p82
      %p84 = scmp.ne.s32.totalorder %s76, %s78
      %p85 = scmp.eq.s32.totalorder %s26, 1
      %p86 = por %p84, %p85
      %p87 = scmp.ne.s32.totalorder %s78, %s79
      %p88 = scmp.eq.s32.totalorder %s26, 0
      %p89 = por %p87, %p88
      %p90 = scmp.ne.s32.totalorder %s78, %s79
      %p91 = scmp.eq.s32.totalorder %s27, 1
      %p92 = por %p90, %p91
      %p94 = scmp.ne.s32.totalorder %s79, %s93
      %p95 = scmp.eq.s32.totalorder %s27, 0
      %p96 = por %p94, %p95
      %s98 = sadd.s32 %s97, 1
      %p101 = scmp.eq.s32.totalorder %s21, 1
      %p102 = scmp.ne.s32.totalorder %s97, %s99
      %p103 = scmp.eq.s32.totalorder %s21, 0
      %p104 = por %p102, %p103
      %p105 = scmp.ne.s32.totalorder %s97, %s99
      %p106 = scmp.eq.s32.totalorder %s26, 1
      %p107 = por %p105, %p106
      %p108 = scmp.ne.s32.totalorder %s99, %s100
      %p109 = scmp.eq.s32.totalorder %s26, 0
      %p110 = por %p108, %p109
      %p111 = scmp.ne.s32.totalorder %s99, %s100
      %p112 = scmp.eq.s32.totalorder %s27, 1
      %p113 = por %p111, %p112
      %p115 = scmp.ne.s32.totalorder %s100, %s114
      %p116 = scmp.eq.s32.totalorder %s27, 0
      %p117 = por %p115, %p116
      %s119 = sadd.s32 %s118, 1
      %p122 = scmp.eq.s32.totalorder %s21, 1
      %p123 = scmp.ne.s32.totalorder %s118, %s120
      %p124 = scmp.eq.s32.totalorder %s21, 0
      %p125 = por %p123, %p124
      %p126 = scmp.ne.s32.totalorder %s118, %s120
      %p127 = scmp.eq.s32.totalorder %s26, 1
      %p128 = por %p126, %p127
      %p129 = scmp.ne.s32.totalorder %s120, %s121
      %p130 = scmp.eq.s32.totalorder %s26, 0
      %p131 = por %p129, %p130
      %p132 = scmp.ne.s32.totalorder %s120, %s121
      %p133 = scmp.eq.s32.totalorder %s27, 1
      %p134 = por %p132, %p133
      %p136 = scmp.ne.s32.totalorder %s121, %s135
      %p137 = scmp.eq.s32.totalorder %s27, 0
      %p138 = por %p136, %p137
      %s140 = sadd.s32 %s139, 1
      %p143 = scmp.eq.s32.totalorder %s21, 1
      %p144 = scmp.ne.s32.totalorder %s139, %s141
      %p145 = scmp.eq.s32.totalorder %s21, 0
      %p146 = por %p144, %p145
      %p147 = scmp.ne.s32.totalorder %s139, %s141
      %p148 = scmp.eq.s32.totalorder %s26, 1
      %p149 = por %p147, %p148
      %p150 = scmp.ne.s32.totalorder %s141, %s142
      %p151 = scmp.eq.s32.totalorder %s26, 0
      %p152 = por %p150, %p151
      %p153 = scmp.ne.s32.totalorder %s141, %s142
      %p154 = scmp.eq.s32.totalorder %s27, 1
      %p155 = por %p153, %p154
      %p157 = scmp.ne.s32.totalorder %s142, %s156
      %p158 = scmp.eq.s32.totalorder %s27, 0
      %p159 = por %p157, %p158
      %s161 = sadd.s32 %s160, 1
      %p164 = scmp.eq.s32.totalorder %s21, 1
      %p165 = scmp.ne.s32.totalorder %s160, %s162
      %p166 = scmp.eq.s32.totalorder %s21, 0
      %p167 = por %p165, %p166
      %p168 = scmp.ne.s32.totalorder %s160, %s162
      %p169 = scmp.eq.s32.totalorder %s26, 1
      %p170 = por %p168, %p169
      %p171 = scmp.ne.s32.totalorder %s162, %s163
      %p172 = scmp.eq.s32.totalorder %s26, 0
      %p173 = por %p171, %p172
      %p174 = scmp.ne.s32.totalorder %s162, %s163
      %p175 = scmp.eq.s32.totalorder %s27, 1
      %p176 = por %p174, %p175
      %p178 = scmp.ne.s32.totalorder %s163, %s177
      %p179 = scmp.eq.s32.totalorder %s27, 0
      %p180 = por %p178, %p179
      %s181 = ssub.s32 %s21, %s28
      %p182 = scmp.eq.s32.totalorder %s181, 0
      %s184 = sadd.s32 %s183, 1
      %s185 = scalar_select %p182, %s183, %s184
      %p188 = pneg %p182
      %p189 = scmp.eq.s32.totalorder %s21, 1
      %p190 = por %p188, %p189
      %p191 = scmp.ne.s32.totalorder %s183, %s186
      %p192 = scmp.eq.s32.totalorder %s21, 0
      %p193 = por %p191, %p192
      %p194 = scmp.ne.s32.totalorder %s183, %s186
      %p195 = scmp.eq.s32.totalorder %s26, 1
      %p196 = por %p194, %p195
      %p197 = scmp.ne.s32.totalorder %s186, %s187
      %p198 = scmp.eq.s32.totalorder %s26, 0
      %p199 = por %p197, %p198
      %p200 = scmp.ne.s32.totalorder %s186, %s187
      %p201 = scmp.eq.s32.totalorder %s27, 1
      %p202 = por %p200, %p201
      %p204 = scmp.ne.s32.totalorder %s187, %s203
      %p205 = scmp.eq.s32.totalorder %s27, 0
      %p206 = por %p204, %p205
      %p207 = scmp.le.s32.totalorder 1, %s21
      %p208 = scmp.lt.s32.totalorder %s21, 3
      %p209 = pnand %p207, %p208
      %p210 = pneg %p209
      // Predicated region
      $region9: #{tpu_custom_call.1} parent=5 // pred_check
        _
      $region10: #{tpu_custom_call.1} parent=5 // pred_check_branch
        %212 = sbr.rel (%p209) target = $region12
      $region11: #{tpu_custom_call.1} parent=5 // pred_region
        %s213 = ssub.s32 %s21, 1
        // Predicated region
        $region13: #{tpu_custom_call.1} parent=11 // pred_check
          %p214 = pneg %p68
        $region14: #{tpu_custom_call.1} parent=11 // pred_check_branch
          %216 = sbr.rel (%p214) target = $region16
        $region15: #{tpu_custom_call.1} parent=11 // pred_region
          %s218 = ssub.s32 128, 128
          %219 = vsyncadd [#allocation6], %s218
          %s220 = sshll.u32 [#allocation5], 4
          %s221 = int_to_ptr.vmem [resolvable:$true] %s220
          %226 = dma.hbm_to_vmem [thread:$0]  %s1, 128, %s221, [#allocation6], 64, 64, 4
        $region16: #{tpu_custom_call.1} parent=11 // pred_fallthru
          _
        // Predicated region
        $region17: #{tpu_custom_call.1} parent=11 // pred_check
          %p227 = pneg %p89
        $region18: #{tpu_custom_call.1} parent=11 // pred_check_branch
          %229 = sbr.rel (%p227) target = $region20
        $region19: #{tpu_custom_call.1} parent=11 // pred_region
          _
        $region20: #{tpu_custom_call.1} parent=11 // pred_fallthru
          _
        // Predicated region
        $region21: #{tpu_custom_call.1} parent=11 // pred_check
          %p230 = pneg %p110
        $region22: #{tpu_custom_call.1} parent=11 // pred_check_branch
          %232 = sbr.rel (%p230) target = $region24
        $region23: #{tpu_custom_call.1} parent=11 // pred_region
          %s234 = ssub.s32 1024, 1024
          %235 = vsyncadd [#allocation6], %s234
          %s236 = sshll.u32 [#allocation7], 4
          %s237 = int_to_ptr.vmem [resolvable:$true] %s236
          %242 = dma.hbm_to_vmem [thread:$0]  %s3, 1024, %s237, [#allocation6], 64, 64, 4
        $region24: #{tpu_custom_call.1} parent=11 // pred_fallthru
          _
        // Predicated region
        $region25: #{tpu_custom_call.1} parent=11 // pred_check
          %p243 = pneg %p131
        $region26: #{tpu_custom_call.1} parent=11 // pred_check_branch
          %245 = sbr.rel (%p243) target = $region28
        $region27: #{tpu_custom_call.1} parent=11 // pred_region
          _
        $region28: #{tpu_custom_call.1} parent=11 // pred_fallthru
          _
        // Predicated region
        $region29: #{tpu_custom_call.1} parent=11 // pred_check
          %p246 = pneg %p152
        $region30: #{tpu_custom_call.1} parent=11 // pred_check_branch
          %248 = sbr.rel (%p246) target = $region32
        $region31: #{tpu_custom_call.1} parent=11 // pred_region
          %s250 = ssub.s32 1024, 1024
          %251 = vsyncadd [#allocation9], %s250
          %s252 = sshll.u32 [#allocation8], 4
          %s253 = int_to_ptr.vmem [resolvable:$true] %s252
          %258 = dma.hbm_to_vmem [thread:$0]  %s5, 1024, %s253, [#allocation9], 64, 64, 4
        $region32: #{tpu_custom_call.1} parent=11 // pred_fallthru
          _
        // Predicated region
        $region33: #{tpu_custom_call.1} parent=11 // pred_check
          %p259 = pneg %p173
        $region34: #{tpu_custom_call.1} parent=11 // pred_check_branch
          %261 = sbr.rel (%p259) target = $region36
        $region35: #{tpu_custom_call.1} parent=11 // pred_region
          _
        $region36: #{tpu_custom_call.1} parent=11 // pred_fallthru
          _
      $region12: #{tpu_custom_call.1} parent=5 // pred_fallthru
        _
      %p262 = scmp.lt.s32.totalorder %s21, 2
      // Predicated region
      $region37: #{tpu_custom_call.1} parent=5 // pred_check
        %p263 = pneg %p262
      $region38: #{tpu_custom_call.1} parent=5 // pred_check_branch
        %265 = sbr.rel (%p263) target = $region40
      $region39: #{tpu_custom_call.1} parent=5 // pred_region
        // Predicated region
        $region41: #{tpu_custom_call.1} parent=39 // pred_check
          %p266 = pneg %p41
        $region42: #{tpu_custom_call.1} parent=39 // pred_check_branch
          %268 = sbr.rel (%p266) target = $region44
        $region43: #{tpu_custom_call.1} parent=39 // pred_region
          %s269 = sand.u32 %s31, 1
          %s270 = scalar_lea.sflag [#allocation3], %s269
          %s271 = sand.u32 %s31, 1
          %s272 = smul.addr %s271, 8
          %s273 = scalar_lea.vmem [#allocation2], %s272
          %s275 = ssub.s32 128, 128
          %276 = vsyncadd %s270, %s275
          %s277 = smul.addr %s21, 128
          %s278 = scalar_lea.hbm %s0, %s277
          %s280 = sshll.u32 %s273, 4
          %s281 = int_to_ptr.vmem [resolvable:$true] %s280
          %283 = dma.hbm_to_vmem [thread:$0]  %s278, 128, %s281, %s270
        $region44: #{tpu_custom_call.1} parent=39 // pred_fallthru
          _
      $region40: #{tpu_custom_call.1} parent=5 // pred_fallthru
        _
      %p284 = scmp.le.s32.totalorder 1, %s21
      %p285 = scmp.lt.s32.totalorder %s21, 3
      %p286 = pnand %p284, %p285
      %p287 = pneg %p286
      // Predicated region
      $region45: #{tpu_custom_call.1} parent=5 // pred_check
        _
      $region46: #{tpu_custom_call.1} parent=5 // pred_check_branch
        %289 = sbr.rel (%p286) target = $region48
      $region47: #{tpu_custom_call.1} parent=5 // pred_region
        %s290 = ssub.s32 %s21, 1
        %s291 = sand.u32 %s34, 1
        %s292 = scalar_lea.sflag [#allocation3], %s291
        %s293 = sand.u32 %s34, 1
        %s294 = smul.addr %s293, 8
        %s295 = scalar_lea.vmem [#allocation2], %s294
        // Predicated region
        $region49: #{tpu_custom_call.1} parent=47 // pred_check
          %p296 = pneg %p47
        $region50: #{tpu_custom_call.1} parent=47 // pred_check_branch
          %298 = sbr.rel (%p296) target = $region52
        $region51: #{tpu_custom_call.1} parent=47 // pred_region
          %299 = dma.done %s292, 128
        $region52: #{tpu_custom_call.1} parent=47 // pred_fallthru
          _
        // Predicated region
        $region53: #{tpu_custom_call.1} parent=47 // pred_check
          %p300 = pneg %p68
        $region54: #{tpu_custom_call.1} parent=47 // pred_check_branch
          %302 = sbr.rel (%p300) target = $region56
        $region55: #{tpu_custom_call.1} parent=47 // pred_region
          %303 = dma.done [#allocation6], 128
        $region56: #{tpu_custom_call.1} parent=47 // pred_fallthru
          _
        // Predicated region
        $region57: #{tpu_custom_call.1} parent=47 // pred_check
          %p304 = pneg %p110
        $region58: #{tpu_custom_call.1} parent=47 // pred_check_branch
          %306 = sbr.rel (%p304) target = $region60
        $region59: #{tpu_custom_call.1} parent=47 // pred_region
          %307 = dma.done [#allocation6], 1024
        $region60: #{tpu_custom_call.1} parent=47 // pred_fallthru
          _
        // Predicated region
        $region61: #{tpu_custom_call.1} parent=47 // pred_check
          %p308 = pneg %p152
        $region62: #{tpu_custom_call.1} parent=47 // pred_check_branch
          %310 = sbr.rel (%p308) target = $region64
        $region63: #{tpu_custom_call.1} parent=47 // pred_region
          %311 = dma.done [#allocation9], 1024
        $region64: #{tpu_custom_call.1} parent=47 // pred_fallthru
          _
        %s312 = sand.u32 %s34, 1
        %s313 = scalar_lea.sflag [#allocation3], %s312
        %s314 = sand.u32 %s34, 1
        %s315 = smul.addr %s314, 8
        %s316 = scalar_lea.vmem [#allocation2], %s315
        %p317 = pneg %p47
        %p318 = pneg %p44
        %p319 = pneg %p68
        %p320 = pneg %p65
        %p321 = pneg %p89
        %p322 = pneg %p86
        %p323 = pneg %p110
        %p324 = pneg %p107
        %p325 = pneg %p131
        %p326 = pneg %p128
        %p327 = pneg %p152
        %p328 = pneg %p149
        %p329 = pneg %p173
        %p330 = pneg %p170
        %p331 = pneg %p199
        %p332 = pneg %p196
        %s333 = sand.u32 %s186, 1
        %s334 = scalar_lea.sflag [#allocation4], %s333
        %s335 = sand.u32 %s186, 1
        %s336 = smul.addr %s335, 4
        %s337 = scalar_lea.vmem [#allocation10], %s336
        %v339 = vld [vmem:[%s295] sm:$0xff]
        %v340 = vpack.c.bf16 %v339, %v339
        %v341 = vld [vmem:[#allocation5] sm:$0xf]
        %v342 = vld [vmem:[#allocation5 + $0x4] sm:$0x3]
        %v343 = vld [vmem:[%s2] sm:$0x1]
        %v345 = vlaneseq
        %v346 = vshrl.u32 %v345, 7
        %v347 = vsub.s32 0, %v346
        %v348 = vrot.slane %v343, %v347
        %v352 = vunpack.c.l.b16 %v341
        %v353 = vunpack.c.l.b16 %v342
        %v354 = vpack.c.b16 %v353, %v352
        %vm355 = vcmask 97280
        %v357 = vsel %vm355, %v340, 0
        %vm359 = vcmask 1045504
        %v361 = vsel %vm359, %v354, 0
        %363 = vmatprep.subr.bf16.mxu0 0
        %364 = vmatpush1.bf16.msra.mxu0 %v361
        %365 = vmatprep.subr.bf16.mxu0 0
        %366 = vmatpush1.bf16.msra.mxu0 0
        %367 = vmatprep.subr.bf16.mxu0 0
        %368 = vmatpush1.bf16.msra.mxu0 0
        %369 = vmatprep.subr.bf16.mxu0 0
        %370 = vmatpush1.bf16.msra.mxu0 0
        %371 = vmatprep.subr.bf16.mxu0 0
        %372 = vmatpush1.bf16.msra.mxu0 0
        %373 = vmatprep.subr.bf16.mxu0 0
        %374 = vmatpush1.bf16.msra.mxu0 0
        %375 = vmatprep.subr.bf16.mxu0 0
        %376 = vmatpush1.bf16.msra.mxu0 0
        %377 = vmatprep.subr.bf16.mxu0 0
        %378 = vmatpush1.bf16.msra.mxu0 0
        %379 = vmatprep.subr.bf16.mxu0 0
        %380 = vmatpush1.bf16.msra.mxu0 0
        %381 = vmatprep.subr.bf16.mxu0 0
        %382 = vmatpush1.bf16.msra.mxu0 0
        %383 = vmatprep.subr.bf16.mxu0 0
        %384 = vmatpush1.bf16.msra.mxu0 0
        %385 = vmatprep.subr.bf16.mxu0 0
        %386 = vmatpush1.bf16.msra.mxu0 0
        %387 = vmatprep.subr.bf16.mxu0 0
        %388 = vmatpush1.bf16.msra.mxu0 0
        %389 = vmatprep.subr.bf16.mxu0 0
        %390 = vmatpush1.bf16.msra.mxu0 0
        %391 = vmatprep.subr.bf16.mxu0 0
        %392 = vmatpush1.bf16.msra.mxu0 0
        %393 = vmatprep.subr.bf16.mxu0 0
        %394 = vmatpush1.bf16.msra.mxu0 0
        %395 = vmatprep.mubr.bf16.mxu0 0
        %396 = vmatmul.mubr.bf16.gmra.mrb[0].mxu0 %v357
        %v397 = vpop.f32.mrb[0].mxu0
        %v398 = vadd.f32 %v348, %v397
        %v399 = vpop.f32.mrb[0].mxu0
        %v400 = vpop.f32.mrb[0].mxu0
        %v401 = vpop.f32.mrb[0].mxu0
        %402 = vdwg.mxu0
        %v403 = vmax.f32 %v398, 0.0
        %v404 = vpack.c.bf16 %v403, %v403
        %v405 = vld [vmem:[#allocation7] sm:$0xf]
        %v406 = vld [vmem:[#allocation7 + $0x4] sm:$0xf]
        %v407 = vld [vmem:[#allocation7 + $0x8] sm:$0xf]
        %v408 = vld [vmem:[#allocation7 + $0xc] sm:$0xf]
        %v409 = vld [vmem:[#allocation7 + $0x10] sm:$0xf]
        %v410 = vld [vmem:[#allocation7 + $0x14] sm:$0xf]
        %v411 = vld [vmem:[#allocation7 + $0x18] sm:$0xf]
        %v412 = vld [vmem:[#allocation7 + $0x1c] sm:$0xf]
        %v413 = vld [vmem:[#allocation7 + $0x20] sm:$0xf]
        %v414 = vld [vmem:[#allocation7 + $0x24] sm:$0xf]
        %v415 = vld [vmem:[#allocation7 + $0x28] sm:$0xf]
        %v416 = vld [vmem:[#allocation7 + $0x2c] sm:$0xf]
        %v417 = vld [vmem:[#allocation7 + $0x30] sm:$0xf]
        %v418 = vld [vmem:[#allocation7 + $0x34] sm:$0xf]
        %v419 = vld [vmem:[#allocation7 + $0x38] sm:$0xf]
        %v420 = vld [vmem:[#allocation7 + $0x3c] sm:$0xf]
        %v421 = vld [vmem:[%s4] sm:$0x1]
        %v423 = vlaneseq
        %v424 = vshrl.u32 %v423, 7
        %v425 = vsub.s32 0, %v424
        %v426 = vrot.slane %v421, %v425
        %v444 = vunpack.c.l.b16 %v405
        %v445 = vunpack.c.l.b16 %v406
        %v446 = vunpack.c.l.b16 %v407
        %v447 = vunpack.c.l.b16 %v408
        %v448 = vunpack.c.l.b16 %v409
        %v449 = vunpack.c.l.b16 %v410
        %v450 = vunpack.c.l.b16 %v411
        %v451 = vunpack.c.l.b16 %v412
        %v452 = vunpack.c.l.b16 %v413
        %v453 = vunpack.c.l.b16 %v414
        %v454 = vunpack.c.l.b16 %v415
        %v455 = vunpack.c.l.b16 %v416
        %v456 = vunpack.c.l.b16 %v417
        %v457 = vunpack.c.l.b16 %v418
        %v458 = vunpack.c.l.b16 %v419
        %v459 = vunpack.c.l.b16 %v420
        %v460 = vpack.c.b16 %v445, %v444
        %v461 = vpack.c.b16 %v447, %v446
        %v462 = vpack.c.b16 %v449, %v448
        %v463 = vpack.c.b16 %v451, %v450
        %v464 = vpack.c.b16 %v453, %v452
        %v465 = vpack.c.b16 %v455, %v454
        %v466 = vpack.c.b16 %v457, %v456
        %v467 = vpack.c.b16 %v459, %v458
        %476 = vmatprep.subr.bf16.mxu0 0
        %477 = vmatpush1.bf16.msra.mxu0 %v460
        %478 = vmatprep.subr.bf16.mxu0 0
        %479 = vmatpush1.bf16.msra.mxu0 %v461
        %480 = vmatprep.subr.bf16.mxu0 0
        %481 = vmatpush1.bf16.msra.mxu0 %v462
        %482 = vmatprep.subr.bf16.mxu0 0
        %483 = vmatpush1.bf16.msra.mxu0 %v463
        %484 = vmatprep.subr.bf16.mxu0 0
        %485 = vmatpush1.bf16.msra.mxu0 %v464
        %486 = vmatprep.subr.bf16.mxu0 0
        %487 = vmatpush1.bf16.msra.mxu0 %v465
        %488 = vmatprep.subr.bf16.mxu0 0
        %489 = vmatpush1.bf16.msra.mxu0 %v466
        %490 = vmatprep.subr.bf16.mxu0 0
        %491 = vmatpush1.bf16.msra.mxu0 %v467
        %492 = vmatprep.subr.bf16.mxu0 0
        %493 = vmatpush1.bf16.msra.mxu0 0
        %494 = vmatprep.subr.bf16.mxu0 0
        %495 = vmatpush1.bf16.msra.mxu0 0
        %496 = vmatprep.subr.bf16.mxu0 0
        %497 = vmatpush1.bf16.msra.mxu0 0
        %498 = vmatprep.subr.bf16.mxu0 0
        %499 = vmatpush1.bf16.msra.mxu0 0
        %500 = vmatprep.subr.bf16.mxu0 0
        %501 = vmatpush1.bf16.msra.mxu0 0
        %502 = vmatprep.subr.bf16.mxu0 0
        %503 = vmatpush1.bf16.msra.mxu0 0
        %504 = vmatprep.subr.bf16.mxu0 0
        %505 = vmatpush1.bf16.msra.mxu0 0
        %506 = vmatprep.subr.bf16.mxu0 0
        %507 = vmatpush1.bf16.msra.mxu0 0
        %508 = vmatprep.mubr.bf16.mxu0 0
        %509 = vmatmul.mubr.bf16.gmra.mrb[0].mxu0 %v404
        %v510 = vpop.f32.mrb[0].mxu0
        %v511 = vadd.f32 %v426, %v510
        %v512 = vpop.f32.mrb[0].mxu0
        %v513 = vpop.f32.mrb[0].mxu0
        %v514 = vpop.f32.mrb[0].mxu0
        %515 = vdwg.mxu0
        %v516 = vmax.f32 %v511, 0.0
        %v517 = vpack.c.bf16 %v516, %v516
        %v518 = vld [vmem:[#allocation8] sm:$0xf]
        %v519 = vld [vmem:[#allocation8 + $0x4] sm:$0xf]
        %v520 = vld [vmem:[#allocation8 + $0x8] sm:$0xf]
        %v521 = vld [vmem:[#allocation8 + $0xc] sm:$0xf]
        %v522 = vld [vmem:[#allocation8 + $0x10] sm:$0xf]
        %v523 = vld [vmem:[#allocation8 + $0x14] sm:$0xf]
        %v524 = vld [vmem:[#allocation8 + $0x18] sm:$0xf]
        %v525 = vld [vmem:[#allocation8 + $0x1c] sm:$0xf]
        %v526 = vld [vmem:[#allocation8 + $0x20] sm:$0xf]
        %v527 = vld [vmem:[#allocation8 + $0x24] sm:$0xf]
        %v528 = vld [vmem:[#allocation8 + $0x28] sm:$0xf]
        %v529 = vld [vmem:[#allocation8 + $0x2c] sm:$0xf]
        %v530 = vld [vmem:[#allocation8 + $0x30] sm:$0xf]
        %v531 = vld [vmem:[#allocation8 + $0x34] sm:$0xf]
        %v532 = vld [vmem:[#allocation8 + $0x38] sm:$0xf]
        %v533 = vld [vmem:[#allocation8 + $0x3c] sm:$0xf]
        %v534 = vld [vmem:[%s6] sm:$0x1]
        %v536 = vlaneseq
        %v537 = vshrl.u32 %v536, 7
        %v538 = vsub.s32 0, %v537
        %v539 = vrot.slane %v534, %v538
        %v557 = vunpack.c.l.b16 %v518
        %v558 = vunpack.c.l.b16 %v519
        %v559 = vunpack.c.l.b16 %v520
        %v560 = vunpack.c.l.b16 %v521
        %v561 = vunpack.c.l.b16 %v522
        %v562 = vunpack.c.l.b16 %v523
        %v563 = vunpack.c.l.b16 %v524
        %v564 = vunpack.c.l.b16 %v525
        %v565 = vunpack.c.l.b16 %v526
        %v566 = vunpack.c.l.b16 %v527
        %v567 = vunpack.c.l.b16 %v528
        %v568 = vunpack.c.l.b16 %v529
        %v569 = vunpack.c.l.b16 %v530
        %v570 = vunpack.c.l.b16 %v531
        %v571 = vunpack.c.l.b16 %v532
        %v572 = vunpack.c.l.b16 %v533
        %v573 = vpack.c.b16 %v558, %v557
        %v574 = vpack.c.b16 %v560, %v559
        %v575 = vpack.c.b16 %v562, %v561
        %v576 = vpack.c.b16 %v564, %v563
        %v577 = vpack.c.b16 %v566, %v565
        %v578 = vpack.c.b16 %v568, %v567
        %v579 = vpack.c.b16 %v570, %v569
        %v580 = vpack.c.b16 %v572, %v571
        %589 = vmatprep.subr.bf16.mxu0 0
        %590 = vmatpush1.bf16.msra.mxu0 %v573
        %591 = vmatprep.subr.bf16.mxu0 0
        %592 = vmatpush1.bf16.msra.mxu0 %v574
        %593 = vmatprep.subr.bf16.mxu0 0
        %594 = vmatpush1.bf16.msra.mxu0 %v575
        %595 = vmatprep.subr.bf16.mxu0 0
        %596 = vmatpush1.bf16.msra.mxu0 %v576
        %597 = vmatprep.subr.bf16.mxu0 0
        %598 = vmatpush1.bf16.msra.mxu0 %v577
        %599 = vmatprep.subr.bf16.mxu0 0
        %600 = vmatpush1.bf16.msra.mxu0 %v578
        %601 = vmatprep.subr.bf16.mxu0 0
        %602 = vmatpush1.bf16.msra.mxu0 %v579
        %603 = vmatprep.subr.bf16.mxu0 0
        %604 = vmatpush1.bf16.msra.mxu0 %v580
        %605 = vmatprep.subr.bf16.mxu0 0
        %606 = vmatpush1.bf16.msra.mxu0 0
        %607 = vmatprep.subr.bf16.mxu0 0
        %608 = vmatpush1.bf16.msra.mxu0 0
        %609 = vmatprep.subr.bf16.mxu0 0
        %610 = vmatpush1.bf16.msra.mxu0 0
        %611 = vmatprep.subr.bf16.mxu0 0
        %612 = vmatpush1.bf16.msra.mxu0 0
        %613 = vmatprep.subr.bf16.mxu0 0
        %614 = vmatpush1.bf16.msra.mxu0 0
        %615 = vmatprep.subr.bf16.mxu0 0
        %616 = vmatpush1.bf16.msra.mxu0 0
        %617 = vmatprep.subr.bf16.mxu0 0
        %618 = vmatpush1.bf16.msra.mxu0 0
        %619 = vmatprep.subr.bf16.mxu0 0
        %620 = vmatpush1.bf16.msra.mxu0 0
        %621 = vmatprep.mubr.bf16.mxu0 0
        %622 = vmatmul.mubr.bf16.gmra.mrb[0].mxu0 %v517
        %v623 = vpop.f32.mrb[0].mxu0
        %v624 = vadd.f32 %v539, %v623
        %v625 = vpop.f32.mrb[0].mxu0
        %v626 = vpop.f32.mrb[0].mxu0
        %v627 = vpop.f32.mrb[0].mxu0
        %628 = vdwg.mxu0
        %v629 = vpack.c.bf16 %v624, %v624
        %630 = vst [vmem:[%s337] sm:$0xf] %v629
        %s631 = sand.u32 %s186, 1
        %s632 = scalar_lea.sflag [#allocation4], %s631
        %s633 = sand.u32 %s186, 1
        %s634 = smul.addr %s633, 4
        %s635 = scalar_lea.vmem [#allocation10], %s634
        // Predicated region
        $region65: #{tpu_custom_call.1} parent=47 // pred_check
          %p636 = pneg %p196
        $region66: #{tpu_custom_call.1} parent=47 // pred_check_branch
          %638 = sbr.rel (%p636) target = $region68
        $region67: #{tpu_custom_call.1} parent=47 // pred_region
          %s640 = ssub.s32 64, 64
          %641 = vsyncadd %s632, %s640
          %s642 = smul.addr %s26, 64
          %s643 = scalar_lea.hbm %s7, %s642
          %s645 = sshll.u32 %s635, 4
          %s646 = int_to_ptr.vmem [resolvable:$true] %s645
          %648 = dma.vmem_to_hbm [thread:$0]  %s646, 64, %s643, %s632
        $region68: #{tpu_custom_call.1} parent=47 // pred_fallthru
          _
      $region48: #{tpu_custom_call.1} parent=5 // pred_fallthru
        _
      %p649 = scmp.le.s32.totalorder 2, %s21
      // Predicated region
      $region69: #{tpu_custom_call.1} parent=5 // pred_check
        %p650 = pneg %p649
      $region70: #{tpu_custom_call.1} parent=5 // pred_check_branch
        %652 = sbr.rel (%p650) target = $region72
      $region71: #{tpu_custom_call.1} parent=5 // pred_region
        %s653 = ssub.s32 %s21, 2
        // Predicated region
        $region73: #{tpu_custom_call.1} parent=71 // pred_check
          %p654 = pneg %p202
        $region74: #{tpu_custom_call.1} parent=71 // pred_check_branch
          %656 = sbr.rel (%p654) target = $region76
        $region75: #{tpu_custom_call.1} parent=71 // pred_region
          %s657 = sand.u32 %s187, 1
          %s658 = scalar_lea.sflag [#allocation4], %s657
          %s659 = sand.u32 %s187, 1
          %s660 = smul.addr %s659, 4
          %s661 = scalar_lea.vmem [#allocation10], %s660
          %662 = dma.done %s658, 64
        $region76: #{tpu_custom_call.1} parent=71 // pred_fallthru
          _
      $region72: #{tpu_custom_call.1} parent=5 // pred_fallthru
        _
    $region6: #{tpu_custom_call.1} parent=1 // loop_footer
      %s25 = sadd.s32 1, %s21
    $region7: #{tpu_custom_call.1} parent=1 // loop_footer_branch
      %20 = sbr.rel target = $region3
    $region8: #{tpu_custom_call.1} parent=1 // loop_exit
      _
    %663 = vsyncpa [#allocation3], 1
    %s664 = scalar_lea.sflag [#allocation3], 1
    %665 = vsyncpa %s664, 1
    %666 = vsyncpa [#allocation6], 1
    %667 = vsyncpa [#allocation9], 1
    %668 = vsyncpa [#allocation4], 1
    %s669 = scalar_lea.sflag [#allocation4], 1
    %670 = vsyncpa %s669, 1

</llo_original>
